<compile_context>
chip_gen: v7x
topology: tpu7x:2x2x1
jax: 0.10.0
libtpu: 0.0.40
codegen_flags: <defaults>
</compile_context>

<pallas_src>
import functools

import numpy as np
import jax
import jax.numpy as jnp
from jax.experimental import pallas as pl
from jax.experimental.pallas import tpu as pltpu


def _pick_tile_rows(H, W, max_lanes=2048):
    """Largest row-tile TH (multiple of 8, divides H, TH*W % 128 == 0, <= max_lanes lanes),
    preferring T = H // TH >= 2 so both TensorCores get work on v7x."""
    cands = []
    for th in range(8, H + 1, 8):
        if H % th:
            continue
        if (th * W) % 128:
            continue
        if th * W > max_lanes:
            continue
        cands.append(th)
    pref = [th for th in cands if H // th >= 2]
    if pref:
        return max(pref)
    if cands:
        return max(cands)
    return H


def _make_kernel(Cin, W, Cout, r, TH, RS):
    L = TH * W                # core lanes per tile (lane = h*W + w)
    LF = (TH + 2) * W         # with top/bottom halo rows
    G = r * r                 # pixel-shuffle groups (i, j)
    rrW = G * W               # lanes per final output row (= r*W*r)

    def kernel(xc_ref, halo_ref, wm_ref, b_ref, m_ref, p_ref, o_ref):
        # ---- window with halos: [top | core | bottom], halos are pipelined inputs ----
        hv = halo_ref[0, 0]                                        # (Cin, 2*W)
        xfull = jnp.concatenate([hv[:, :W], xc_ref[0], hv[:, W:]], axis=-1)  # (Cin, LF)

        # resident W-edge lane masks (hoisted to a tiny constant input)
        mv = m_ref[...]
        keep_l = mv[0:1, :]                                        # (1, L): col != 0
        keep_r = mv[1:2, :]                                        # (1, L): col != W-1
        zcol = jnp.zeros((Cin, 1), jnp.float32)

        # ---- im2col: 9 shifted taps -> (9*Cin, TH*W) ----
        taps = []
        for dy in range(3):
            for dx in range(3):
                start = dy * W + dx - 1
                if start < 0:                        # (dy=0, dx=0): shift right, zero fill
                    v = jnp.concatenate([zcol, xfull[:, :L - 1]], axis=-1)
                elif start + L > LF:                 # (dy=2, dx=2): shift left, zero fill
                    v = jnp.concatenate([xfull[:, start:], zcol], axis=-1)
                else:
                    v = xfull[:, start:start + L]
                if dx == 0:
                    v = v * keep_l
                elif dx == 2:
                    v = v * keep_r
                taps.append(v)
        pat = jnp.concatenate(taps, axis=0)          # (9*Cin, L)

        # ---- conv: one MXU matmul, K = 9*Cin; bias + ReLU commute with the shuffle ----
        acc = jnp.dot(wm_ref[...], pat, preferred_element_type=jnp.float32)  # (Ct, L)
        acc = jnp.maximum(acc + b_ref[...], 0.0)

        # ---- fused PixelShuffle: one permutation matmul per RS output rows, wide row stores ----
        # acc row = q*Cout + c (q = i*r + j), lane = h*W + w.
        # Output block (1, Cout, TH, r*W*r); row h lane = i*(r*W) + w*r + j.
        pshuf = p_ref[...]                           # (G*RS*W, RS*rrW), 0/1 permutation
        for hb in range(TH // RS):
            h0 = hb * RS
            g = jnp.concatenate(
                [acc[q * Cout:(q + 1) * Cout, h0 * W:(h0 + RS) * W] for q in range(G)],
                axis=-1)                                            # (Cout, G*RS*W)
            res = jnp.dot(g, pshuf, preferred_element_type=jnp.float32)  # (Cout, RS*rrW)
            for hp in range(RS):
                o_ref[0, :, h0 + hp, :] = res[:, hp * rrW:(hp + 1) * rrW]

    return kernel


def subpixel_conv_block(x_nchw, weight, bias, upscale_factor=2, tile_rows=None):
    """x_nchw: (N, Cin, H, W); weight: (Cout*r^2, Cin, 3, 3) OIHW; bias: (Cout*r^2,)."""
    r = upscale_factor
    N, Cin, H, W = x_nchw.shape
    Ct = weight.shape[0]
    assert Ct % (r * r) == 0
    Cout = Ct // (r * r)
    G = r * r
    rrW = G * W                                   # = r*W*r lanes per output row

    x_nchw = x_nchw.astype(jnp.float32)

    TH = tile_rows if tile_rows is not None else _pick_tile_rows(H, W)
    if H % TH or (TH != H and ((TH * W) % 128 or TH % 8)):
        TH = H
    T = H // TH

    # rows of the final image handled by one pixel-shuffle permutation matmul
    RS = 1
    for cand in (8, 4, 2):
        if TH % cand == 0 and G * cand * W <= 512:
            RS = cand
            break

    x_flat = x_nchw.reshape(N, Cin, H * W)        # free reshape, no padding / transpose

    # ---- per-tile halo rows (top | bottom), zeros at the image border -> pipelined input ----
    t_idx = jnp.arange(T)
    row_top = t_idx * TH - 1
    row_bot = t_idx * TH + TH
    top = jnp.take(x_nchw, jnp.clip(row_top, 0, H - 1), axis=2)          # (N, Cin, T, W)
    top = jnp.where((row_top >= 0)[None, None, :, None], top, 0.0)
    bot = jnp.take(x_nchw, jnp.clip(row_bot, 0, H - 1), axis=2)
    bot = jnp.where((row_bot < H)[None, None, :, None], bot, 0.0)
    halos = jnp.transpose(jnp.concatenate([top, bot], axis=-1), (0, 2, 1, 3))  # (N, T, Cin, 2W)

    # ---- weight reorder: PyTorch channel packing (c*r^2 + i*r + j) -> row q*Cout + c ----
    rows = jnp.arange(Ct)
    sub = rows // Cout                            # q = i*r + j
    ch = rows % Cout                              # c
    torch_oc = ch * (r * r) + sub
    wk = jnp.transpose(weight.astype(jnp.float32), (0, 2, 3, 1)).reshape(Ct, 9 * Cin)
    wm = wk[torch_oc]                                                   # (Ct, 9*Cin)
    b2 = bias.astype(jnp.float32)[torch_oc].reshape(Ct, 1)              # (Ct, 1)

    # ---- resident W-edge lane masks (hoisted out of the kernel body) ----
    col = np.arange(TH * W) % W
    m = jnp.asarray(np.stack([(col != 0), (col != W - 1)]).astype(np.float32))  # (2, L)

    # ---- PixelShuffle interleave permutation, batched over RS rows ----
    # src lane = q*(RS*W) + hp*W + w  ->  dst lane = hp*(r*r*W) + i*(r*W) + w*r + j,  q = i*r + j
    src = np.arange(G * RS * W)
    q_i = src // (RS * W)
    rem = src % (RS * W)
    hp_i = rem // W
    w_i = rem % W
    dst = hp_i * rrW + (q_i // r) * (r * W) + w_i * r + (q_i % r)
    P = np.zeros((G * RS * W, RS * rrW), np.float32)
    P[src, dst] = 1.0
    pshuf = jnp.asarray(P)

    kernel = _make_kernel(Cin, W, Cout, r, TH, RS)

    out = pl.pallas_call(
        kernel,
        out_shape=jax.ShapeDtypeStruct((N, Cout, H, rrW), jnp.float32),
        grid_spec=pltpu.PrefetchScalarGridSpec(
            num_scalar_prefetch=0,
            grid=(N, T),
            in_specs=[
                pl.BlockSpec((1, Cin, TH * W), lambda n, t: (n, 0, t)),     # core rows
                pl.BlockSpec((1, 1, Cin, 2 * W), lambda n, t: (n, t, 0, 0)),  # halo rows
                pl.BlockSpec((Ct, 9 * Cin), lambda n, t: (0, 0)),           # weights (resident)
                pl.BlockSpec((Ct, 1), lambda n, t: (0, 0)),                 # bias
                pl.BlockSpec((2, TH * W), lambda n, t: (0, 0)),             # edge masks
                pl.BlockSpec((G * RS * W, RS * rrW), lambda n, t: (0, 0)),  # shuffle permutation
            ],
            out_specs=pl.BlockSpec((1, Cout, TH, rrW), lambda n, t: (n, 0, t, 0)),
        ),
        compiler_params=pltpu.CompilerParams(
            dimension_semantics=("parallel", "parallel"),
            vmem_limit_bytes=16 * 1024 * 1024,
        ),
    )(x_flat, halos, wm, b2, m, pshuf)

    # (N, Cout, H, r*W*r) and (N, Cout, H*r, W*r) share the same memory layout -> free reshape.
    return out.reshape(N, Cout, H * r, W * r)


def _reference(x_nchw, weight, bias, r):
    """Pure-JAX reference for verification."""
    y = jax.lax.conv_general_dilated(
        x_nchw.astype(jnp.float32), weight.astype(jnp.float32),
        window_strides=(1, 1), padding=((1, 1), (1, 1)),
        dimension_numbers=("NCHW", "OIHW", "NCHW"))
    y = y + bias.reshape(1, -1, 1, 1)
    N, Ct, H, W = y.shape
    Cout = Ct // (r * r)
    y = y.reshape(N, Cout, r, r, H, W)
    y = jnp.transpose(y, (0, 1, 4, 2, 5, 3)).reshape(N, Cout, H * r, W * r)
    return jnp.maximum(y, 0.0)


if __name__ == "__main__":
    key = jax.random.PRNGKey(0)
    k_x, k_w, k_b = jax.random.split(key, 3)

    N, Cin, H, W = 2, 4, 16, 16
    Cout, r = 4, 2
    Ct = Cout * r * r

    x = jax.random.normal(k_x, (N, Cin, H, W), dtype=jnp.float32)
    fan_in = Cin * 3 * 3
    bound = 1.0 / (fan_in ** 0.5)
    weight = jax.random.uniform(k_w, (Ct, Cin, 3, 3), jnp.float32, -bound, bound)
    bias = jax.random.uniform(k_b, (Ct,), jnp.float32, -bound, bound)

    fn = jax.jit(functools.partial(subpixel_conv_block, upscale_factor=r))
    out = jax.block_until_ready(fn(x, weight, bias))

    ref = _reference(x, weight, bias, r)
    assert out.shape == (N, Cout, H * r, W * r), out.shape
    assert jnp.allclose(out, ref, atol=1e-4, rtol=1e-4), \
        float(jnp.max(jnp.abs(out - ref)))

    print("KERNEL_OK")
</pallas_src>

<mosaic_0001>
module attributes {stable_mosaic.version = 11 : i64} {
  func.func @kernel(%arg0: i32, %arg1: i32, %arg2: memref<1x4x128xf32, #tpu.memory_space<vmem>>, %arg3: memref<1x1x4x32xf32, #tpu.memory_space<vmem>>, %arg4: memref<16x36xf32, #tpu.memory_space<vmem>>, %arg5: memref<16x1xf32, #tpu.memory_space<vmem>>, %arg6: memref<2x128xf32, #tpu.memory_space<vmem>>, %arg7: memref<512x512xf32, #tpu.memory_space<vmem>>, %arg8: memref<1x4x8x64xf32, #tpu.memory_space<vmem>>) attributes {dimension_semantics = [#tpu.dimension_semantics<parallel>, #tpu.dimension_semantics<parallel>], iteration_bounds = array<i64: 2, 2>, scalar_prefetch = 0 : i64, scratch_operands = 0 : i64, tpu.core_type = #tpu.core_type<tc>, window_params = [{transform_indices = @transform_0, window_bounds = array<i64: 1, 4, 128>}, {transform_indices = @transform_1, window_bounds = array<i64: 1, 1, 4, 32>}, {pipeline_mode = #tpu.pipeline_mode<synchronous>, transform_indices = @transform_2, window_bounds = array<i64: 16, 36>}, {pipeline_mode = #tpu.pipeline_mode<synchronous>, transform_indices = @transform_3, window_bounds = array<i64: 16, 1>}, {pipeline_mode = #tpu.pipeline_mode<synchronous>, transform_indices = @transform_4, window_bounds = array<i64: 2, 128>}, {pipeline_mode = #tpu.pipeline_mode<synchronous>, transform_indices = @transform_5, window_bounds = array<i64: 512, 512>}, {transform_indices = @transform_6, window_bounds = array<i64: 1, 4, 8, 64>}]} {
    %c0 = arith.constant 0 : index
    %c0_0 = arith.constant 0 : index
    %c0_1 = arith.constant 0 : index
    %c0_2 = arith.constant 0 : index
    %0 = vector.load %arg3[%c0, %c0_0, %c0_1, %c0_2] : memref<1x1x4x32xf32, #tpu.memory_space<vmem>>, vector<1x1x4x32xf32>
    %1 = vector.shape_cast %0 : vector<1x1x4x32xf32> to vector<4x32xf32>
    %2 = vector.extract_strided_slice %1 {offsets = [0, 0], sizes = [4, 16], strides = [1, 1]} : vector<4x32xf32> to vector<4x16xf32>
    %c0_3 = arith.constant 0 : index
    %c0_4 = arith.constant 0 : index
    %c0_5 = arith.constant 0 : index
    %3 = vector.load %arg2[%c0_3, %c0_4, %c0_5] : memref<1x4x128xf32, #tpu.memory_space<vmem>>, vector<1x4x128xf32>
    %4 = vector.shape_cast %3 : vector<1x4x128xf32> to vector<4x128xf32>
    %5 = vector.extract_strided_slice %1 {offsets = [0, 16], sizes = [4, 16], strides = [1, 1]} : vector<4x32xf32> to vector<4x16xf32>
    %6 = tpu.concatenate %2, %4, %5 in 1 : vector<4x16xf32>, vector<4x128xf32>, vector<4x16xf32> -> vector<4x160xf32>
    %c0_6 = arith.constant 0 : index
    %c0_7 = arith.constant 0 : index
    %7 = vector.load %arg6[%c0_6, %c0_7] : memref<2x128xf32, #tpu.memory_space<vmem>>, vector<2x128xf32>
    %8 = vector.extract_strided_slice %7 {offsets = [0, 0], sizes = [1, 128], strides = [1, 1]} : vector<2x128xf32> to vector<1x128xf32>
    %9 = vector.extract_strided_slice %7 {offsets = [1, 0], sizes = [1, 128], strides = [1, 1]} : vector<2x128xf32> to vector<1x128xf32>
    %cst = arith.constant 0.000000e+00 : f32
    %10 = vector.broadcast %cst : f32 to vector<4x1xf32>
    %11 = vector.extract_strided_slice %6 {offsets = [0, 0], sizes = [4, 127], strides = [1, 1]} : vector<4x160xf32> to vector<4x127xf32>
    %12 = tpu.concatenate %10, %11 in 1 : vector<4x1xf32>, vector<4x127xf32> -> vector<4x128xf32>
    %13 = vector.broadcast %8 : vector<1x128xf32> to vector<4x128xf32>
    %14 = arith.mulf %12, %13 : vector<4x128xf32>
    %15 = vector.extract_strided_slice %6 {offsets = [0, 0], sizes = [4, 128], strides = [1, 1]} : vector<4x160xf32> to vector<4x128xf32>
    %16 = vector.extract_strided_slice %6 {offsets = [0, 1], sizes = [4, 128], strides = [1, 1]} : vector<4x160xf32> to vector<4x128xf32>
    %17 = vector.broadcast %9 : vector<1x128xf32> to vector<4x128xf32>
    %18 = arith.mulf %16, %17 : vector<4x128xf32>
    %19 = vector.extract_strided_slice %6 {offsets = [0, 15], sizes = [4, 128], strides = [1, 1]} : vector<4x160xf32> to vector<4x128xf32>
    %20 = vector.broadcast %8 : vector<1x128xf32> to vector<4x128xf32>
    %21 = arith.mulf %19, %20 : vector<4x128xf32>
    %22 = vector.extract_strided_slice %6 {offsets = [0, 16], sizes = [4, 128], strides = [1, 1]} : vector<4x160xf32> to vector<4x128xf32>
    %23 = vector.extract_strided_slice %6 {offsets = [0, 17], sizes = [4, 128], strides = [1, 1]} : vector<4x160xf32> to vector<4x128xf32>
    %24 = vector.broadcast %9 : vector<1x128xf32> to vector<4x128xf32>
    %25 = arith.mulf %23, %24 : vector<4x128xf32>
    %26 = vector.extract_strided_slice %6 {offsets = [0, 31], sizes = [4, 128], strides = [1, 1]} : vector<4x160xf32> to vector<4x128xf32>
    %27 = vector.broadcast %8 : vector<1x128xf32> to vector<4x128xf32>
    %28 = arith.mulf %26, %27 : vector<4x128xf32>
    %29 = vector.extract_strided_slice %6 {offsets = [0, 32], sizes = [4, 128], strides = [1, 1]} : vector<4x160xf32> to vector<4x128xf32>
    %30 = vector.extract_strided_slice %6 {offsets = [0, 33], sizes = [4, 127], strides = [1, 1]} : vector<4x160xf32> to vector<4x127xf32>
    %31 = tpu.concatenate %30, %10 in 1 : vector<4x127xf32>, vector<4x1xf32> -> vector<4x128xf32>
    %32 = vector.broadcast %9 : vector<1x128xf32> to vector<4x128xf32>
    %33 = arith.mulf %31, %32 : vector<4x128xf32>
    %34 = tpu.concatenate %14, %15, %18, %21, %22, %25, %28, %29, %33 in 0 : vector<4x128xf32>, vector<4x128xf32>, vector<4x128xf32>, vector<4x128xf32>, vector<4x128xf32>, vector<4x128xf32>, vector<4x128xf32>, vector<4x128xf32>, vector<4x128xf32> -> vector<36x128xf32>
    %c0_8 = arith.constant 0 : index
    %c0_9 = arith.constant 0 : index
    %35 = vector.load %arg4[%c0_8, %c0_9] : memref<16x36xf32, #tpu.memory_space<vmem>>, vector<16x36xf32>
    %cst_10 = arith.constant dense<0.000000e+00> : vector<16x128xf32>
    %36 = tpu.matmul %35, %34, %cst_10 {dimension_numbers = #tpu.dot_dimension_numbers<[1], [0], [0], [1], [0, 0, 1, 1], [], []>} : vector<16x36xf32>, vector<36x128xf32>, vector<16x128xf32> -> vector<16x128xf32>
    %c0_11 = arith.constant 0 : index
    %c0_12 = arith.constant 0 : index
    %37 = vector.load %arg5[%c0_11, %c0_12] : memref<16x1xf32, #tpu.memory_space<vmem>>, vector<16x1xf32>
    %38 = vector.broadcast %37 : vector<16x1xf32> to vector<16x128xf32>
    %39 = arith.addf %36, %38 : vector<16x128xf32>
    %cst_13 = arith.constant 0.000000e+00 : f32
    %40 = vector.broadcast %cst_13 : f32 to vector<16x128xf32>
    %41 = arith.maximumf %39, %40 : vector<16x128xf32>
    %c0_14 = arith.constant 0 : index
    %c0_15 = arith.constant 0 : index
    %42 = vector.load %arg7[%c0_14, %c0_15] : memref<512x512xf32, #tpu.memory_space<vmem>>, vector<512x512xf32>
    %43 = vector.extract_strided_slice %41 {offsets = [0, 0], sizes = [4, 128], strides = [1, 1]} : vector<16x128xf32> to vector<4x128xf32>
    %44 = vector.extract_strided_slice %41 {offsets = [4, 0], sizes = [4, 128], strides = [1, 1]} : vector<16x128xf32> to vector<4x128xf32>
    %45 = vector.extract_strided_slice %41 {offsets = [8, 0], sizes = [4, 128], strides = [1, 1]} : vector<16x128xf32> to vector<4x128xf32>
    %46 = vector.extract_strided_slice %41 {offsets = [12, 0], sizes = [4, 128], strides = [1, 1]} : vector<16x128xf32> to vector<4x128xf32>
    %47 = tpu.concatenate %43, %44, %45, %46 in 1 : vector<4x128xf32>, vector<4x128xf32>, vector<4x128xf32>, vector<4x128xf32> -> vector<4x512xf32>
    %cst_16 = arith.constant dense<0.000000e+00> : vector<4x512xf32>
    %48 = tpu.matmul %47, %42, %cst_16 {dimension_numbers = #tpu.dot_dimension_numbers<[1], [0], [0], [1], [0, 0, 1, 1], [], []>} : vector<4x512xf32>, vector<512x512xf32>, vector<4x512xf32> -> vector<4x512xf32>
    %49 = vector.extract_strided_slice %48 {offsets = [0, 0], sizes = [4, 64], strides = [1, 1]} : vector<4x512xf32> to vector<4x64xf32>
    %c0_17 = arith.constant 0 : index
    %c0_18 = arith.constant 0 : index
    %c0_19 = arith.constant 0 : index
    %c0_20 = arith.constant 0 : index
    %50 = vector.load %arg8[%c0_17, %c0_18, %c0_19, %c0_20] : memref<1x4x8x64xf32, #tpu.memory_space<vmem>>, vector<1x4x1x64xf32>
    %51 = vector.shape_cast %50 : vector<1x4x1x64xf32> to vector<4x64xf32>
    %52 = vector.shape_cast %49 : vector<4x64xf32> to vector<1x4x1x64xf32>
    tpu.vector_store %arg8[%c0_17, %c0_18, %c0_19, %c0_20], %52 {strides = array<i32>} : memref<1x4x8x64xf32, #tpu.memory_space<vmem>>, vector<1x4x1x64xf32>,
    %53 = vector.extract_strided_slice %48 {offsets = [0, 64], sizes = [4, 64], strides = [1, 1]} : vector<4x512xf32> to vector<4x64xf32>
    %c0_21 = arith.constant 0 : index
    %c0_22 = arith.constant 0 : index
    %c1 = arith.constant 1 : index
    %c0_23 = arith.constant 0 : index
    %54 = vector.load %arg8[%c0_21, %c0_22, %c1, %c0_23] : memref<1x4x8x64xf32, #tpu.memory_space<vmem>>, vector<1x4x1x64xf32>
    %55 = vector.shape_cast %54 : vector<1x4x1x64xf32> to vector<4x64xf32>
    %56 = vector.shape_cast %53 : vector<4x64xf32> to vector<1x4x1x64xf32>
    tpu.vector_store %arg8[%c0_21, %c0_22, %c1, %c0_23], %56 {strides = array<i32>} : memref<1x4x8x64xf32, #tpu.memory_space<vmem>>, vector<1x4x1x64xf32>,
    %57 = vector.extract_strided_slice %48 {offsets = [0, 128], sizes = [4, 64], strides = [1, 1]} : vector<4x512xf32> to vector<4x64xf32>
    %c0_24 = arith.constant 0 : index
    %c0_25 = arith.constant 0 : index
    %c2 = arith.constant 2 : index
    %c0_26 = arith.constant 0 : index
    %58 = vector.load %arg8[%c0_24, %c0_25, %c2, %c0_26] : memref<1x4x8x64xf32, #tpu.memory_space<vmem>>, vector<1x4x1x64xf32>
    %59 = vector.shape_cast %58 : vector<1x4x1x64xf32> to vector<4x64xf32>
    %60 = vector.shape_cast %57 : vector<4x64xf32> to vector<1x4x1x64xf32>
    tpu.vector_store %arg8[%c0_24, %c0_25, %c2, %c0_26], %60 {strides = array<i32>} : memref<1x4x8x64xf32, #tpu.memory_space<vmem>>, vector<1x4x1x64xf32>,
    %61 = vector.extract_strided_slice %48 {offsets = [0, 192], sizes = [4, 64], strides = [1, 1]} : vector<4x512xf32> to vector<4x64xf32>
    %c0_27 = arith.constant 0 : index
    %c0_28 = arith.constant 0 : index
    %c3 = arith.constant 3 : index
    %c0_29 = arith.constant 0 : index
    %62 = vector.load %arg8[%c0_27, %c0_28, %c3, %c0_29] : memref<1x4x8x64xf32, #tpu.memory_space<vmem>>, vector<1x4x1x64xf32>
    %63 = vector.shape_cast %62 : vector<1x4x1x64xf32> to vector<4x64xf32>
    %64 = vector.shape_cast %61 : vector<4x64xf32> to vector<1x4x1x64xf32>
    tpu.vector_store %arg8[%c0_27, %c0_28, %c3, %c0_29], %64 {strides = array<i32>} : memref<1x4x8x64xf32, #tpu.memory_space<vmem>>, vector<1x4x1x64xf32>,
    %65 = vector.extract_strided_slice %48 {offsets = [0, 256], sizes = [4, 64], strides = [1, 1]} : vector<4x512xf32> to vector<4x64xf32>
    %c0_30 = arith.constant 0 : index
    %c0_31 = arith.constant 0 : index
    %c4 = arith.constant 4 : index
    %c0_32 = arith.constant 0 : index
    %66 = vector.load %arg8[%c0_30, %c0_31, %c4, %c0_32] : memref<1x4x8x64xf32, #tpu.memory_space<vmem>>, vector<1x4x1x64xf32>
    %67 = vector.shape_cast %66 : vector<1x4x1x64xf32> to vector<4x64xf32>
    %68 = vector.shape_cast %65 : vector<4x64xf32> to vector<1x4x1x64xf32>
    tpu.vector_store %arg8[%c0_30, %c0_31, %c4, %c0_32], %68 {strides = array<i32>} : memref<1x4x8x64xf32, #tpu.memory_space<vmem>>, vector<1x4x1x64xf32>,
    %69 = vector.extract_strided_slice %48 {offsets = [0, 320], sizes = [4, 64], strides = [1, 1]} : vector<4x512xf32> to vector<4x64xf32>
    %c0_33 = arith.constant 0 : index
    %c0_34 = arith.constant 0 : index
    %c5 = arith.constant 5 : index
    %c0_35 = arith.constant 0 : index
    %70 = vector.load %arg8[%c0_33, %c0_34, %c5, %c0_35] : memref<1x4x8x64xf32, #tpu.memory_space<vmem>>, vector<1x4x1x64xf32>
    %71 = vector.shape_cast %70 : vector<1x4x1x64xf32> to vector<4x64xf32>
    %72 = vector.shape_cast %69 : vector<4x64xf32> to vector<1x4x1x64xf32>
    tpu.vector_store %arg8[%c0_33, %c0_34, %c5, %c0_35], %72 {strides = array<i32>} : memref<1x4x8x64xf32, #tpu.memory_space<vmem>>, vector<1x4x1x64xf32>,
    %73 = vector.extract_strided_slice %48 {offsets = [0, 384], sizes = [4, 64], strides = [1, 1]} : vector<4x512xf32> to vector<4x64xf32>
    %c0_36 = arith.constant 0 : index
    %c0_37 = arith.constant 0 : index
    %c6 = arith.constant 6 : index
    %c0_38 = arith.constant 0 : index
    %74 = vector.load %arg8[%c0_36, %c0_37, %c6, %c0_38] : memref<1x4x8x64xf32, #tpu.memory_space<vmem>>, vector<1x4x1x64xf32>
    %75 = vector.shape_cast %74 : vector<1x4x1x64xf32> to vector<4x64xf32>
    %76 = vector.shape_cast %73 : vector<4x64xf32> to vector<1x4x1x64xf32>
    tpu.vector_store %arg8[%c0_36, %c0_37, %c6, %c0_38], %76 {strides = array<i32>} : memref<1x4x8x64xf32, #tpu.memory_space<vmem>>, vector<1x4x1x64xf32>,
    %77 = vector.extract_strided_slice %48 {offsets = [0, 448], sizes = [4, 64], strides = [1, 1]} : vector<4x512xf32> to vector<4x64xf32>
    %c0_39 = arith.constant 0 : index
    %c0_40 = arith.constant 0 : index
    %c7 = arith.constant 7 : index
    %c0_41 = arith.constant 0 : index
    %78 = vector.load %arg8[%c0_39, %c0_40, %c7, %c0_41] : memref<1x4x8x64xf32, #tpu.memory_space<vmem>>, vector<1x4x1x64xf32>
    %79 = vector.shape_cast %78 : vector<1x4x1x64xf32> to vector<4x64xf32>
    %80 = vector.shape_cast %77 : vector<4x64xf32> to vector<1x4x1x64xf32>
    tpu.vector_store %arg8[%c0_39, %c0_40, %c7, %c0_41], %80 {strides = array<i32>} : memref<1x4x8x64xf32, #tpu.memory_space<vmem>>, vector<1x4x1x64xf32>,
    return
  }
  func.func @transform_0(%arg0: i32, %arg1: i32) -> (i32, i32, i32) {
    %c0_i32 = arith.constant 0 : i32
    %c0_i32_0 = arith.constant 0 : i32
    return %arg0, %c0_i32, %arg1 : i32, i32, i32
  }
  func.func @transform_1(%arg0: i32, %arg1: i32) -> (i32, i32, i32, i32) {
    %c0_i32 = arith.constant 0 : i32
    %c0_i32_0 = arith.constant 0 : i32
    %c0_i32_1 = arith.constant 0 : i32
    return %arg0, %arg1, %c0_i32, %c0_i32_0 : i32, i32, i32, i32
  }
  func.func @transform_2(%arg0: i32, %arg1: i32) -> (i32, i32) {
    %c0_i32 = arith.constant 0 : i32
    %c0_i32_0 = arith.constant 0 : i32
    %c0_i32_1 = arith.constant 0 : i32
    return %c0_i32, %c0_i32_0 : i32, i32
  }
  func.func @transform_3(%arg0: i32, %arg1: i32) -> (i32, i32) {
    %c0_i32 = arith.constant 0 : i32
    %c0_i32_0 = arith.constant 0 : i32
    %c0_i32_1 = arith.constant 0 : i32
    return %c0_i32, %c0_i32_0 : i32, i32
  }
  func.func @transform_4(%arg0: i32, %arg1: i32) -> (i32, i32) {
    %c0_i32 = arith.constant 0 : i32
    %c0_i32_0 = arith.constant 0 : i32
    %c0_i32_1 = arith.constant 0 : i32
    return %c0_i32, %c0_i32_0 : i32, i32
  }
  func.func @transform_5(%arg0: i32, %arg1: i32) -> (i32, i32) {
    %c0_i32 = arith.constant 0 : i32
    %c0_i32_0 = arith.constant 0 : i32
    %c0_i32_1 = arith.constant 0 : i32
    return %c0_i32, %c0_i32_0 : i32, i32
  }
  func.func @transform_6(%arg0: i32, %arg1: i32) -> (i32, i32, i32, i32) {
    %c0_i32 = arith.constant 0 : i32
    %c0_i32_0 = arith.constant 0 : i32
    %c0_i32_1 = arith.constant 0 : i32
    return %arg0, %c0_i32, %arg1, %c0_i32_0 : i32, i32, i32, i32
  }
}

</mosaic_0001>

<llo_original>
// kernel: subpixel_conv_block.1
$region0: #{subpixel_conv_block.1}
  #allocation0 [shape = 'u32[]', space=smem, size = 0x4, offset = 0x4, fixed_abs, tag = 'smem constant byte address 0x4 - core index']
  #allocation1 [shape = 'u32[144,128]{1,0:T(1,128)}', space=vmem, size = 0x12000, scoped, tag = 'internal scratch']
  %s0 = inlined_call_operand.vmem [shape: f32[2,4,256], index: 0, kind: input, shape index: {}]
  %s1 = inlined_call_operand.vmem [shape: f32[2,2,4,32], index: 1, kind: input, shape index: {}]
  %s2 = inlined_call_operand.vmem [shape: f32[16,36], index: 2, kind: input, shape index: {}]
  %s3 = inlined_call_operand.vmem [shape: f32[16,1], index: 3, kind: input, shape index: {}]
  %s4 = inlined_call_operand.vmem [shape: f32[2,128], index: 4, kind: input, shape index: {}]
  %s5 = inlined_call_operand.hbm [shape: f32[512,512], index: 5, kind: input, shape index: {}]
  %s6 = inlined_call_operand.vmem [shape: f32[2,4,16,64], index: 6, kind: output, shape index: {}]
  %s7 = sld [smem:[#allocation0]]
  $region95: #{subpixel_conv_block.1} parent=0
    _
  %s9 = ssub.s32 1, %s7
  %s10 = scalar_select 0, %s9, %s7
  $region1: #{subpixel_conv_block.1} parent=0
    #allocation2 [shape = 'u8[1048576]{0}', space=vmem, size = 0x100000, scoped, tag = 'input window, operand 5, single buffered']
    #allocation3 [shape = 's32[2]{0}', space=sflag, size = 0x8, scoped, tag = 'scoped memory for subpixel_conv_block.1']
    #allocation4 [shape = 'u8[32768]{0}', space=vmem, size = 0x8000, scoped, tag = 'output window, operand 0']
    %11 = vsyncpa [#allocation3], 0
    loop: start=0, step=1, limit=6
    $region2: #{subpixel_conv_block.1} parent=1 // loop_pre_header
      _
    $region3: #{subpixel_conv_block.1} parent=1 // loop_header
      %s13 = sphi 0, %s17
      %p14 = scmp.ge.s32.totalorder %s13, 6
      %s20 = sphi 0, %s32
      %s21 = sphi 0, %s28
      %s22 = sphi 0, %s20
      %s23 = sphi 0, %s21
      %s24 = sphi 0, %s22
      %s25 = sphi 0, %s23
      %s37 = sphi 0, %s39
      %s40 = sphi 0, %s37
      %s41 = sphi 0, %s40
      %s57 = sphi 0, %s41
      %s65 = sphi 0, %s67
      %s68 = sphi 0, %s65
      %s69 = sphi 0, %s68
      %s85 = sphi 0, %s69
      %s89 = sphi 0, %s89
      %s91 = sphi 0, %s89
      %s92 = sphi 0, %s91
      %s106 = sphi 0, %s92
      %s110 = sphi 0, %s110
      %s112 = sphi 0, %s110
      %s113 = sphi 0, %s112
      %s127 = sphi 0, %s113
      %s131 = sphi 0, %s131
      %s133 = sphi 0, %s131
      %s134 = sphi 0, %s133
      %s148 = sphi 0, %s134
      %s152 = sphi 0, %s152
      %s154 = sphi 0, %s152
      %s155 = sphi 0, %s154
      %s169 = sphi 0, %s155
      %s177 = sphi 0, %s179
      %s180 = sphi 0, %s177
      %s181 = sphi 0, %s180
      %s197 = sphi 0, %s181
    $region4: #{subpixel_conv_block.1} parent=1 // loop_header_branch
      %16 = sbr.rel (%p14) target = $region8
    $region5: #{subpixel_conv_block.1} parent=1 // loop_body
      %s18 = ssub.s32 %s13, 1
      %s19 = ssub.s32 %s13, 2
      %s26 = sadd.s32 1, %s21
      %p27 = scmp.ge.s32.totalorder %s26, 2
      %s28 = scalar_select %p27, 0, %s26
      %s29 = sadd.s32 1, %s20
      %s30 = scalar_select %p27, %s29, %s20
      %p31 = scmp.ge.s32.totalorder %s30, 2
      %s32 = scalar_select %p31, 0, %s30
      %s33 = ssub.s32 %s20, %s32
      %s34 = ssub.s32 %s21, %s28
      %s35 = sor.u32 %s33, %s34
      %p36 = scmp.eq.s32.totalorder %s35, 0
      %s38 = sadd.s32 %s37, 1
      %s39 = scalar_select %p36, %s37, %s38
      %p42 = pneg %p36
      %p43 = scmp.eq.s32.totalorder %s13, 3
      %p44 = por %p42, %p43
      %p45 = scmp.ne.s32.totalorder %s37, %s40
      %p46 = scmp.eq.s32.totalorder %s13, 0
      %p47 = por %p45, %p46
      %p48 = scmp.ne.s32.totalorder %s37, %s40
      %p49 = scmp.eq.s32.totalorder %s18, 3
      %p50 = por %p48, %p49
      %p51 = scmp.ne.s32.totalorder %s40, %s41
      %p52 = scmp.eq.s32.totalorder %s18, 0
      %p53 = por %p51, %p52
      %p54 = scmp.ne.s32.totalorder %s40, %s41
      %p55 = scmp.eq.s32.totalorder %s19, 3
      %p56 = por %p54, %p55
      %p58 = scmp.ne.s32.totalorder %s41, %s57
      %p59 = scmp.eq.s32.totalorder %s19, 0
      %p60 = por %p58, %p59
      %s61 = ssub.s32 %s20, %s32
      %s62 = ssub.s32 %s21, %s28
      %s63 = sor.u32 %s61, %s62
      %p64 = scmp.eq.s32.totalorder %s63, 0
      %s66 = sadd.s32 %s65, 1
      %s67 = scalar_select %p64, %s65, %s66
      %p70 = pneg %p64
      %p71 = scmp.eq.s32.totalorder %s13, 3
      %p72 = por %p70, %p71
      %p73 = scmp.ne.s32.totalorder %s65, %s68
      %p74 = scmp.eq.s32.totalorder %s13, 0
      %p75 = por %p73, %p74
      %p76 = scmp.ne.s32.totalorder %s65, %s68
      %p77 = scmp.eq.s32.totalorder %s18, 3
      %p78 = por %p76, %p77
      %p79 = scmp.ne.s32.totalorder %s68, %s69
      %p80 = scmp.eq.s32.totalorder %s18, 0
      %p81 = por %p79, %p80
      %p82 = scmp.ne.s32.totalorder %s68, %s69
      %p83 = scmp.eq.s32.totalorder %s19, 3
      %p84 = por %p82, %p83
      %p86 = scmp.ne.s32.totalorder %s69, %s85
      %p87 = scmp.eq.s32.totalorder %s19, 0
      %p88 = por %p86, %p87
      %s90 = sadd.s32 %s89, 1
      %p93 = scmp.eq.s32.totalorder %s13, 3
      %p94 = scmp.ne.s32.totalorder %s89, %s91
      %p95 = scmp.eq.s32.totalorder %s13, 0
      %p96 = por %p94, %p95
      %p97 = scmp.ne.s32.totalorder %s89, %s91
      %p98 = scmp.eq.s32.totalorder %s18, 3
      %p99 = por %p97, %p98
      %p100 = scmp.ne.s32.totalorder %s91, %s92
      %p101 = scmp.eq.s32.totalorder %s18, 0
      %p102 = por %p100, %p101
      %p103 = scmp.ne.s32.totalorder %s91, %s92
      %p104 = scmp.eq.s32.totalorder %s19, 3
      %p105 = por %p103, %p104
      %p107 = scmp.ne.s32.totalorder %s92, %s106
      %p108 = scmp.eq.s32.totalorder %s19, 0
      %p109 = por %p107, %p108
      %s111 = sadd.s32 %s110, 1
      %p114 = scmp.eq.s32.totalorder %s13, 3
      %p115 = scmp.ne.s32.totalorder %s110, %s112
      %p116 = scmp.eq.s32.totalorder %s13, 0
      %p117 = por %p115, %p116
      %p118 = scmp.ne.s32.totalorder %s110, %s112
      %p119 = scmp.eq.s32.totalorder %s18, 3
      %p120 = por %p118, %p119
      %p121 = scmp.ne.s32.totalorder %s112, %s113
      %p122 = scmp.eq.s32.totalorder %s18, 0
      %p123 = por %p121, %p122
      %p124 = scmp.ne.s32.totalorder %s112, %s113
      %p125 = scmp.eq.s32.totalorder %s19, 3
      %p126 = por %p124, %p125
      %p128 = scmp.ne.s32.totalorder %s113, %s127
      %p129 = scmp.eq.s32.totalorder %s19, 0
      %p130 = por %p128, %p129
      %s132 = sadd.s32 %s131, 1
      %p135 = scmp.eq.s32.totalorder %s13, 3
      %p136 = scmp.ne.s32.totalorder %s131, %s133
      %p137 = scmp.eq.s32.totalorder %s13, 0
      %p138 = por %p136, %p137
      %p139 = scmp.ne.s32.totalorder %s131, %s133
      %p140 = scmp.eq.s32.totalorder %s18, 3
      %p141 = por %p139, %p140
      %p142 = scmp.ne.s32.totalorder %s133, %s134
      %p143 = scmp.eq.s32.totalorder %s18, 0
      %p144 = por %p142, %p143
      %p145 = scmp.ne.s32.totalorder %s133, %s134
      %p146 = scmp.eq.s32.totalorder %s19, 3
      %p147 = por %p145, %p146
      %p149 = scmp.ne.s32.totalorder %s134, %s148
      %p150 = scmp.eq.s32.totalorder %s19, 0
      %p151 = por %p149, %p150
      %s153 = sadd.s32 %s152, 1
      %p156 = scmp.eq.s32.totalorder %s13, 3
      %p157 = scmp.ne.s32.totalorder %s152, %s154
      %p158 = scmp.eq.s32.totalorder %s13, 0
      %p159 = por %p157, %p158
      %p160 = scmp.ne.s32.totalorder %s152, %s154
      %p161 = scmp.eq.s32.totalorder %s18, 3
      %p162 = por %p160, %p161
      %p163 = scmp.ne.s32.totalorder %s154, %s155
      %p164 = scmp.eq.s32.totalorder %s18, 0
      %p165 = por %p163, %p164
      %p166 = scmp.ne.s32.totalorder %s154, %s155
      %p167 = scmp.eq.s32.totalorder %s19, 3
      %p168 = por %p166, %p167
      %p170 = scmp.ne.s32.totalorder %s155, %s169
      %p171 = scmp.eq.s32.totalorder %s19, 0
      %p172 = por %p170, %p171
      %s173 = ssub.s32 %s20, %s32
      %s174 = ssub.s32 %s21, %s28
      %s175 = sor.u32 %s173, %s174
      %p176 = scmp.eq.s32.totalorder %s175, 0
      %s178 = sadd.s32 %s177, 1
      %s179 = scalar_select %p176, %s177, %s178
      %p182 = pneg %p176
      %p183 = scmp.eq.s32.totalorder %s13, 3
      %p184 = por %p182, %p183
      %p185 = scmp.ne.s32.totalorder %s177, %s180
      %p186 = scmp.eq.s32.totalorder %s13, 0
      %p187 = por %p185, %p186
      %p188 = scmp.ne.s32.totalorder %s177, %s180
      %p189 = scmp.eq.s32.totalorder %s18, 3
      %p190 = por %p188, %p189
      %p191 = scmp.ne.s32.totalorder %s180, %s181
      %p192 = scmp.eq.s32.totalorder %s18, 0
      %p193 = por %p191, %p192
      %p194 = scmp.ne.s32.totalorder %s180, %s181
      %p195 = scmp.eq.s32.totalorder %s19, 3
      %p196 = por %p194, %p195
      %p198 = scmp.ne.s32.totalorder %s181, %s197
      %p199 = scmp.eq.s32.totalorder %s19, 0
      %p200 = por %p198, %p199
      %p201 = scmp.le.s32.totalorder 1, %s13
      %p202 = scmp.lt.s32.totalorder %s13, 5
      %p203 = pnand %p201, %p202
      %p204 = pneg %p203
      // Predicated region
      $region9: #{subpixel_conv_block.1} parent=5 // pred_check
        _
      $region10: #{subpixel_conv_block.1} parent=5 // pred_check_branch
        %206 = sbr.rel (%p203) target = $region12
      $region11: #{subpixel_conv_block.1} parent=5 // pred_region
        %s207 = ssub.s32 %s13, 1
        // Predicated region
        $region13: #{subpixel_conv_block.1} parent=11 // pred_check
          %p208 = pneg %p102
        $region14: #{subpixel_conv_block.1} parent=11 // pred_check_branch
          %210 = sbr.rel (%p208) target = $region16
        $region15: #{subpixel_conv_block.1} parent=11 // pred_region
          _
        $region16: #{subpixel_conv_block.1} parent=11 // pred_fallthru
          _
        // Predicated region
        $region17: #{subpixel_conv_block.1} parent=11 // pred_check
          %p211 = pneg %p123
        $region18: #{subpixel_conv_block.1} parent=11 // pred_check_branch
          %213 = sbr.rel (%p211) target = $region20
        $region19: #{subpixel_conv_block.1} parent=11 // pred_region
          _
        $region20: #{subpixel_conv_block.1} parent=11 // pred_fallthru
          _
        // Predicated region
        $region21: #{subpixel_conv_block.1} parent=11 // pred_check
          %p214 = pneg %p144
        $region22: #{subpixel_conv_block.1} parent=11 // pred_check_branch
          %216 = sbr.rel (%p214) target = $region24
        $region23: #{subpixel_conv_block.1} parent=11 // pred_region
          _
        $region24: #{subpixel_conv_block.1} parent=11 // pred_fallthru
          _
        // Predicated region
        $region25: #{subpixel_conv_block.1} parent=11 // pred_check
          %p217 = pneg %p165
        $region26: #{subpixel_conv_block.1} parent=11 // pred_check_branch
          %219 = sbr.rel (%p217) target = $region28
        $region27: #{subpixel_conv_block.1} parent=11 // pred_region
          %s221 = ssub.s32 32768, 32768
          %222 = vsyncadd [#allocation3], %s221
          %s223 = sshll.u32 [#allocation2], 4
          %s224 = int_to_ptr.vmem [resolvable:$true] %s223
          %229 = dma.hbm_to_vmem [thread:$0]  %s5, 32768, %s224, [#allocation3], 512, 512, 32
        $region28: #{subpixel_conv_block.1} parent=11 // pred_fallthru
          _
      $region12: #{subpixel_conv_block.1} parent=5 // pred_fallthru
        _
      %p230 = scmp.lt.s32.totalorder %s13, 4
      // Predicated region
      $region29: #{subpixel_conv_block.1} parent=5 // pred_check
        %p231 = pneg %p230
      $region30: #{subpixel_conv_block.1} parent=5 // pred_check_branch
        %233 = sbr.rel (%p231) target = $region32
      $region31: #{subpixel_conv_block.1} parent=5 // pred_region
        // Predicated region
        $region33: #{subpixel_conv_block.1} parent=31 // pred_check
          %p234 = pneg %p47
        $region34: #{subpixel_conv_block.1} parent=31 // pred_check_branch
          %236 = sbr.rel (%p234) target = $region36
        $region35: #{subpixel_conv_block.1} parent=31 // pred_region
          %p237 = scmp.lt.s32.totalorder %s20, 1
          %s238 = scalar_select %p237, %s20, 1
          %p239 = scmp.lt.s32.totalorder %s21, 1
          %s240 = scalar_select %p239, %s21, 1
          %s241 = smul.addr %s238, 2
          %s242 = sadd.s32 %s240, %s241
          %s243 = smul.addr %s242, 4
          %s244 = scalar_lea.vmem %s0, %s243
        $region36: #{subpixel_conv_block.1} parent=31 // pred_fallthru
          _
        // Predicated region
        $region37: #{subpixel_conv_block.1} parent=31 // pred_check
          %p245 = pneg %p75
        $region38: #{subpixel_conv_block.1} parent=31 // pred_check_branch
          %247 = sbr.rel (%p245) target = $region40
        $region39: #{subpixel_conv_block.1} parent=31 // pred_region
          %p248 = scmp.lt.s32.totalorder %s20, 1
          %s249 = scalar_select %p248, %s20, 1
          %p250 = scmp.lt.s32.totalorder %s21, 1
          %s251 = scalar_select %p250, %s21, 1
          %s252 = smul.addr %s249, 2
          %s253 = sadd.s32 %s251, %s252
          %s254 = smul.addr %s253, 4
          %s255 = scalar_lea.vmem %s1, %s254
        $region40: #{subpixel_conv_block.1} parent=31 // pred_fallthru
          _
      $region32: #{subpixel_conv_block.1} parent=5 // pred_fallthru
        _
      %p256 = scmp.le.s32.totalorder 1, %s13
      %p257 = scmp.lt.s32.totalorder %s13, 5
      %p258 = pnand %p256, %p257
      %p259 = pneg %p258
      // Predicated region
      $region41: #{subpixel_conv_block.1} parent=5 // pred_check
        _
      $region42: #{subpixel_conv_block.1} parent=5 // pred_check_branch
        %261 = sbr.rel (%p258) target = $region44
      $region43: #{subpixel_conv_block.1} parent=5 // pred_region
        %s262 = ssub.s32 %s13, 1
        // Predicated region
        $region45: #{subpixel_conv_block.1} parent=43 // pred_check
          %p263 = pneg %p165
        $region46: #{subpixel_conv_block.1} parent=43 // pred_check_branch
          %265 = sbr.rel (%p263) target = $region48
        $region47: #{subpixel_conv_block.1} parent=43 // pred_region
          %266 = dma.done [#allocation3], 32768
        $region48: #{subpixel_conv_block.1} parent=43 // pred_fallthru
          _
        %p267 = scmp.lt.s32.totalorder %s22, 1
        %s268 = scalar_select %p267, %s22, 1
        %p269 = scmp.lt.s32.totalorder %s23, 1
        %s270 = scalar_select %p269, %s23, 1
        %s271 = smul.addr %s268, 2
        %s272 = sadd.s32 %s270, %s271
        %s273 = smul.addr %s272, 4
        %s274 = scalar_lea.vmem %s0, %s273
        %p275 = pneg %p53
        %p276 = pneg %p50
        %p277 = scmp.lt.s32.totalorder %s22, 1
        %s278 = scalar_select %p277, %s22, 1
        %p279 = scmp.lt.s32.totalorder %s23, 1
        %s280 = scalar_select %p279, %s23, 1
        %s281 = smul.addr %s278, 2
        %s282 = sadd.s32 %s280, %s281
        %s283 = smul.addr %s282, 4
        %s284 = scalar_lea.vmem %s1, %s283
        %p285 = pneg %p81
        %p286 = pneg %p78
        %p287 = pneg %p102
        %p288 = pneg %p99
        %p289 = pneg %p123
        %p290 = pneg %p120
        %p291 = pneg %p144
        %p292 = pneg %p141
        %p293 = pneg %p165
        %p294 = pneg %p162
        %p295 = pneg %p193
        %p296 = pneg %p190
        %s297 = sand.u32 %s180, 1
        %s298 = sand.u32 %s180, 1
        %s299 = smul.addr %s298, 32
        %s300 = scalar_lea.vmem [#allocation4], %s299
        %p301 = scmp.lt.s32.totalorder %s22, 1
        %s302 = scalar_select %p301, %s22, 1
        %p303 = scmp.lt.s32.totalorder %s23, 1
        %s304 = scalar_select %p303, %s23, 1
        %s305 = smul.addr %s302, 2
        %s306 = sadd.s32 %s304, %s305
        %s307 = smul.addr %s306, 4
        %s308 = scalar_lea.vmem %s0, %s307
        %p309 = scmp.lt.s32.totalorder %s22, 1
        %s310 = scalar_select %p309, %s22, 1
        %p311 = scmp.lt.s32.totalorder %s23, 1
        %s312 = scalar_select %p311, %s23, 1
        %s313 = smul.addr %s310, 2
        %s314 = sadd.s32 %s312, %s313
        %s315 = smul.addr %s314, 4
        %s316 = scalar_lea.vmem %s1, %s315
        %v317 = vld [vmem:[%s316] sm:$0xf]
        %v318 = vld [vmem:[%s308] sm:$0xf]
        %320 = vrot.lane.b32.xlu0 %v318, 16
        %v321 = vpop.permute.xlu0 %320
        %vm323 = vcmask 130048
        %v324 = vsel %vm323, %v317, %v321
        %v325 = vsel %vm323, %v321, %v317
        %v326 = vld [vmem:[%s4] sm:$0x3]
        %328 = vrot.lane.b32.xlu0 %v324, 1
        %v329 = vpop.permute.xlu0 %328
        %vm331 = vcmask 7168
        %v332 = vsel %vm331, 0.0, %v329
        %v333 = vlaneseq
        %v334 = vshrl.u32 %v333, 7
        %v335 = vsub.s32 0, %v334
        %v336 = vrot.slane %v326, %v335
        %v337 = vmul.f32 %v332, %v336
        %v338 = vlaneseq
        %v339 = vshrl.u32 %v338, 7
        %v340 = vsub.s32 1, %v339
        %v341 = vrot.slane %v326, %v340
        %343 = vrot.lane.b32.xlu0 %v341, 1
        %v344 = vpop.permute.xlu0 %343
        %v346 = vmul.f32 %v324, %v344
        %v347 = vmul.f32 %v325, %v344
        %349 = vrot.lane.b32.xlu0 %v336, 15
        %v350 = vpop.permute.xlu0 %349
        %v352 = vmul.f32 %v324, %v350
        %v353 = vmul.f32 %v325, %v350
        %354 = vrot.lane.b32.xlu0 %v341, 17
        %v355 = vpop.permute.xlu0 %354
        %v357 = vmul.f32 %v324, %v355
        %v358 = vmul.f32 %v325, %v355
        %359 = vrot.lane.b32.xlu0 %v336, 31
        %v360 = vpop.permute.xlu0 %359
        %v362 = vmul.f32 %v324, %v360
        %v363 = vmul.f32 %v325, %v360
        %365 = vrot.lane.b32.xlu0 %v324, 95
        %v366 = vpop.permute.xlu0 %365
        %367 = vrot.lane.b32.xlu0 %v325, 95
        %v368 = vpop.permute.xlu0 %367
        %vm369 = vcmask 777216
        %v370 = vsel %vm369, %v366, %v368
        %vm372 = vcmask 1039360
        %v373 = vsel %vm372, %v370, 0.0
        %v374 = vmul.f32 %v373, %v341
        %v375 = vrot.slane %v324, 4
        %379 = vrot.lane.b32.xlu0 %v346, 127
        %v380 = vpop.permute.xlu0 %379
        %381 = vrot.lane.b32.xlu0 %v347, 127
        %v382 = vpop.permute.xlu0 %381
        %v383 = vsel %vm372, %v380, %v382
        %v387 = vrot.slane %v352, 4
        %v388 = vrot.slane %v353, 4
        %389 = vrot.lane.b32.xlu0 %v387, 113
        %v390 = vpop.permute.xlu0 %389
        %391 = vrot.lane.b32.xlu0 %v388, 113
        %v392 = vpop.permute.xlu0 %391
        %vm393 = vcmask 924672
        %v394 = vsel %vm393, %v390, %v392
        %396 = vrot.lane.b32.xlu0 %v324, 112
        %v397 = vpop.permute.xlu0 %396
        %398 = vrot.lane.b32.xlu0 %v325, 112
        %v399 = vpop.permute.xlu0 %398
        %vm400 = vcmask 916480
        %v401 = vsel %vm400, %v397, %v399
        %v405 = vrot.slane %v357, 4
        %v406 = vrot.slane %v358, 4
        %407 = vrot.lane.b32.xlu0 %v405, 111
        %v408 = vpop.permute.xlu0 %407
        %409 = vrot.lane.b32.xlu0 %v406, 111
        %v410 = vpop.permute.xlu0 %409
        %vm411 = vcmask 908288
        %v412 = vsel %vm411, %v408, %v410
        %416 = vrot.lane.b32.xlu0 %v362, 97
        %v417 = vpop.permute.xlu0 %416
        %418 = vrot.lane.b32.xlu0 %v363, 97
        %v419 = vpop.permute.xlu0 %418
        %vm420 = vcmask 793600
        %v421 = vsel %vm420, %v417, %v419
        %v423 = vrot.slane %v325, 4
        %424 = vrot.lane.b32.xlu0 %v375, 96
        %v425 = vpop.permute.xlu0 %424
        %426 = vrot.lane.b32.xlu0 %v423, 96
        %v427 = vpop.permute.xlu0 %426
        %vm428 = vcmask 785408
        %v429 = vsel %vm428, %v425, %v427
        %vm431 = vcmask 1043456
        %v432 = vsel %vm431, %v337, %v375
        %v433 = vsel %vm431, %v383, %v394
        %v434 = vsel %vm431, %v401, %v412
        %v435 = vsel %vm431, %v421, %v429
        %v436 = vld [vmem:[%s2] sm:$0xff]
        %v437 = vld [vmem:[%s2 + $0x8] sm:$0xff]
        %v438 = vld [vmem:[%s3] sm:$0xff]
        %v439 = vld [vmem:[%s3 + $0x8] sm:$0xff]
        %441 = vset.pattern.permute.xlu0 0
        %442 = vperm.xlu0 %441, %v438
        %v443 = vpop.permute.xlu0 %442
        %446 = vset.pattern.permute.xlu0 0
        %447 = vperm.xlu0 %446, %v439
        %v448 = vpop.permute.xlu0 %447
        %vm450 = vcmask 293888
        %v452 = vsel %vm450, %v436, 0
        %v455 = vsel %vm450, %v437, 0
        %v458 = vsel %vm431, %v374, 0
        %460 = vmatprep.subr.mxu0 0.0
        %461 = vmatpush1.msra.mxu0 %v432
        %462 = vmatprep.subr.mxu0 0.0
        %463 = vmatpush1.msra.mxu0 %v433
        %464 = vmatprep.subr.mxu0 0.0
        %465 = vmatpush1.msra.mxu0 %v434
        %466 = vmatprep.subr.mxu0 0.0
        %467 = vmatpush1.msra.mxu0 %v435
        %468 = vmatprep.subr.mxu0 0.0
        %469 = vmatpush1.msra.mxu0 %v458
        %470 = vmatprep.subr.mxu0 0.0
        %471 = vmatpush1.msra.mxu0 0.0
        %472 = vmatprep.subr.mxu0 0.0
        %473 = vmatpush1.msra.mxu0 0.0
        %474 = vmatprep.subr.mxu0 0.0
        %475 = vmatpush1.msra.mxu0 0.0
        %476 = vmatprep.subr.mxu0 0.0
        %477 = vmatpush1.msra.mxu0 0.0
        %478 = vmatprep.subr.mxu0 0.0
        %479 = vmatpush1.msra.mxu0 0.0
        %480 = vmatprep.subr.mxu0 0.0
        %481 = vmatpush1.msra.mxu0 0.0
        %482 = vmatprep.subr.mxu0 0.0
        %483 = vmatpush1.msra.mxu0 0.0
        %484 = vmatprep.subr.mxu0 0.0
        %485 = vmatpush1.msra.mxu0 0.0
        %486 = vmatprep.subr.mxu0 0.0
        %487 = vmatpush1.msra.mxu0 0.0
        %488 = vmatprep.subr.mxu0 0.0
        %489 = vmatpush1.msra.mxu0 0.0
        %490 = vmatprep.subr.mxu0 0.0
        %491 = vmatpush1.msra.mxu0 0.0
        %492 = vmatprep.subr.mxu0 0.0
        %493 = vmatpush1.msra.mxu0 0.0
        %494 = vmatprep.subr.mxu0 0.0
        %495 = vmatpush1.msra.mxu0 0.0
        %496 = vmatprep.subr.mxu0 0.0
        %497 = vmatpush1.msra.mxu0 0.0
        %498 = vmatprep.subr.mxu0 0.0
        %499 = vmatpush1.msra.mxu0 0.0
        %500 = vmatprep.subr.mxu0 0.0
        %501 = vmatpush1.msra.mxu0 0.0
        %502 = vmatprep.subr.mxu0 0.0
        %503 = vmatpush1.msra.mxu0 0.0
        %504 = vmatprep.subr.mxu0 0.0
        %505 = vmatpush1.msra.mxu0 0.0
        %506 = vmatprep.subr.mxu0 0.0
        %507 = vmatpush1.msra.mxu0 0.0
        %508 = vmatprep.subr.mxu0 0.0
        %509 = vmatpush1.msra.mxu0 0.0
        %510 = vmatprep.subr.mxu0 0.0
        %511 = vmatpush1.msra.mxu0 0.0
        %512 = vmatprep.subr.mxu0 0.0
        %513 = vmatpush1.msra.mxu0 0.0
        %514 = vmatprep.subr.mxu0 0.0
        %515 = vmatpush1.msra.mxu0 0.0
        %516 = vmatprep.subr.mxu0 0.0
        %517 = vmatpush1.msra.mxu0 0.0
        %518 = vmatprep.subr.mxu0 0.0
        %519 = vmatpush1.msra.mxu0 0.0
        %520 = vmatprep.subr.mxu0 0.0
        %521 = vmatpush1.msra.mxu0 0.0
        %522 = vmatprep.subr.mxu0 0.0
        %523 = vmatpush1.msra.mxu0 0.0
        %524 = vmatprep.mubr.f32.mxu0 0.0
        %525 = vmatmul.mubr.f32.gmra.mrb[0].mxu0 %v452
        %v526 = vpop.f32.mrb[0].mxu0
        %v527 = vadd.f32 %v443, %v526
        %v528 = vpop.f32.mrb[0].mxu0
        %529 = vmatprep.mubr.f32.mxu0 0.0
        %530 = vmatmul.mubr.f32.gmra.mrb[0].mxu0 %v455
        %v531 = vpop.f32.mrb[0].mxu0
        %v532 = vadd.f32 %v448, %v531
        %v533 = vpop.f32.mrb[0].mxu0
        %534 = vdwg.mxu0
        %v535 = vmax.f32 %v527, 0.0
        %v536 = vmax.f32 %v532, 0.0
        %v537 = vld [vmem:[#allocation2] sm:$0xff]
        %v538 = vld [vmem:[#allocation2 + $0x8] sm:$0xff]
        %v539 = vld [vmem:[#allocation2 + $0x10] sm:$0xff]
        %v540 = vld [vmem:[#allocation2 + $0x18] sm:$0xff]
        %v541 = vld [vmem:[#allocation2 + $0x20] sm:$0xff]
        %v542 = vld [vmem:[#allocation2 + $0x28] sm:$0xff]
        %v543 = vld [vmem:[#allocation2 + $0x30] sm:$0xff]
        %v544 = vld [vmem:[#allocation2 + $0x38] sm:$0xff]
        %v545 = vld [vmem:[#allocation2 + $0x40] sm:$0xff]
        %v546 = vld [vmem:[#allocation2 + $0x48] sm:$0xff]
        %v547 = vld [vmem:[#allocation2 + $0x50] sm:$0xff]
        %v548 = vld [vmem:[#allocation2 + $0x58] sm:$0xff]
        %v549 = vld [vmem:[#allocation2 + $0x60] sm:$0xff]
        %v550 = vld [vmem:[#allocation2 + $0x68] sm:$0xff]
        %v551 = vld [vmem:[#allocation2 + $0x70] sm:$0xff]
        %v552 = vld [vmem:[#allocation2 + $0x78] sm:$0xff]
        %v553 = vld [vmem:[#allocation2 + $0x80] sm:$0xff]
        %v554 = vld [vmem:[#allocation2 + $0x88] sm:$0xff]
        %v555 = vld [vmem:[#allocation2 + $0x90] sm:$0xff]
        %v556 = vld [vmem:[#allocation2 + $0x98] sm:$0xff]
        %v557 = vld [vmem:[#allocation2 + $0xa0] sm:$0xff]
        %v558 = vld [vmem:[#allocation2 + $0xa8] sm:$0xff]
        %v559 = vld [vmem:[#allocation2 + $0xb0] sm:$0xff]
        %v560 = vld [vmem:[#allocation2 + $0xb8] sm:$0xff]
        %v561 = vld [vmem:[#allocation2 + $0xc0] sm:$0xff]
        %v562 = vld [vmem:[#allocation2 + $0xc8] sm:$0xff]
        %v563 = vld [vmem:[#allocation2 + $0xd0] sm:$0xff]
        %v564 = vld [vmem:[#allocation2 + $0xd8] sm:$0xff]
        %v565 = vld [vmem:[#allocation2 + $0xe0] sm:$0xff]
        %v566 = vld [vmem:[#allocation2 + $0xe8] sm:$0xff]
        %v567 = vld [vmem:[#allocation2 + $0xf0] sm:$0xff]
        %v568 = vld [vmem:[#allocation2 + $0xf8] sm:$0xff]
        %v569 = vld [vmem:[#allocation2 + $0x100] sm:$0xff]
        %v570 = vld [vmem:[#allocation2 + $0x108] sm:$0xff]
        %v571 = vld [vmem:[#allocation2 + $0x110] sm:$0xff]
        %v572 = vld [vmem:[#allocation2 + $0x118] sm:$0xff]
        %v573 = vld [vmem:[#allocation2 + $0x120] sm:$0xff]
        %v574 = vld [vmem:[#allocation2 + $0x128] sm:$0xff]
        %v575 = vld [vmem:[#allocation2 + $0x130] sm:$0xff]
        %v576 = vld [vmem:[#allocation2 + $0x138] sm:$0xff]
        %v577 = vld [vmem:[#allocation2 + $0x140] sm:$0xff]
        %v578 = vld [vmem:[#allocation2 + $0x148] sm:$0xff]
        %v579 = vld [vmem:[#allocation2 + $0x150] sm:$0xff]
        %v580 = vld [vmem:[#allocation2 + $0x158] sm:$0xff]
        %v581 = vld [vmem:[#allocation2 + $0x160] sm:$0xff]
        %v582 = vld [vmem:[#allocation2 + $0x168] sm:$0xff]
        %v583 = vld [vmem:[#allocation2 + $0x170] sm:$0xff]
        %v584 = vld [vmem:[#allocation2 + $0x178] sm:$0xff]
        %v585 = vld [vmem:[#allocation2 + $0x180] sm:$0xff]
        %v586 = vld [vmem:[#allocation2 + $0x188] sm:$0xff]
        %v587 = vld [vmem:[#allocation2 + $0x190] sm:$0xff]
        %v588 = vld [vmem:[#allocation2 + $0x198] sm:$0xff]
        %v589 = vld [vmem:[#allocation2 + $0x1a0] sm:$0xff]
        %v590 = vld [vmem:[#allocation2 + $0x1a8] sm:$0xff]
        %v591 = vld [vmem:[#allocation2 + $0x1b0] sm:$0xff]
        %v592 = vld [vmem:[#allocation2 + $0x1b8] sm:$0xff]
        %v593 = vld [vmem:[#allocation2 + $0x1c0] sm:$0xff]
        %v594 = vld [vmem:[#allocation2 + $0x1c8] sm:$0xff]
        %v595 = vld [vmem:[#allocation2 + $0x1d0] sm:$0xff]
        %v596 = vld [vmem:[#allocation2 + $0x1d8] sm:$0xff]
        %v597 = vld [vmem:[#allocation2 + $0x1e0] sm:$0xff]
        %v598 = vld [vmem:[#allocation2 + $0x1e8] sm:$0xff]
        %v599 = vld [vmem:[#allocation2 + $0x1f0] sm:$0xff]
        %v600 = vld [vmem:[#allocation2 + $0x1f8] sm:$0xff]
        %v601 = vld [vmem:[#allocation2 + $0x200] sm:$0xff]
        %v602 = vld [vmem:[#allocation2 + $0x208] sm:$0xff]
        %v603 = vld [vmem:[#allocation2 + $0x210] sm:$0xff]
        %v604 = vld [vmem:[#allocation2 + $0x218] sm:$0xff]
        %v605 = vld [vmem:[#allocation2 + $0x220] sm:$0xff]
        %v606 = vld [vmem:[#allocation2 + $0x228] sm:$0xff]
        %v607 = vld [vmem:[#allocation2 + $0x230] sm:$0xff]
        %v608 = vld [vmem:[#allocation2 + $0x238] sm:$0xff]
        %v609 = vld [vmem:[#allocation2 + $0x240] sm:$0xff]
        %v610 = vld [vmem:[#allocation2 + $0x248] sm:$0xff]
        %v611 = vld [vmem:[#allocation2 + $0x250] sm:$0xff]
        %v612 = vld [vmem:[#allocation2 + $0x258] sm:$0xff]
        %v613 = vld [vmem:[#allocation2 + $0x260] sm:$0xff]
        %v614 = vld [vmem:[#allocation2 + $0x268] sm:$0xff]
        %v615 = vld [vmem:[#allocation2 + $0x270] sm:$0xff]
        %v616 = vld [vmem:[#allocation2 + $0x278] sm:$0xff]
        %v617 = vld [vmem:[#allocation2 + $0x280] sm:$0xff]
        %v618 = vld [vmem:[#allocation2 + $0x288] sm:$0xff]
        %v619 = vld [vmem:[#allocation2 + $0x290] sm:$0xff]
        %v620 = vld [vmem:[#allocation2 + $0x298] sm:$0xff]
        %v621 = vld [vmem:[#allocation2 + $0x2a0] sm:$0xff]
        %v622 = vld [vmem:[#allocation2 + $0x2a8] sm:$0xff]
        %v623 = vld [vmem:[#allocation2 + $0x2b0] sm:$0xff]
        %v624 = vld [vmem:[#allocation2 + $0x2b8] sm:$0xff]
        %v625 = vld [vmem:[#allocation2 + $0x2c0] sm:$0xff]
        %v626 = vld [vmem:[#allocation2 + $0x2c8] sm:$0xff]
        %v627 = vld [vmem:[#allocation2 + $0x2d0] sm:$0xff]
        %v628 = vld [vmem:[#allocation2 + $0x2d8] sm:$0xff]
        %v629 = vld [vmem:[#allocation2 + $0x2e0] sm:$0xff]
        %v630 = vld [vmem:[#allocation2 + $0x2e8] sm:$0xff]
        %v631 = vld [vmem:[#allocation2 + $0x2f0] sm:$0xff]
        %v632 = vld [vmem:[#allocation2 + $0x2f8] sm:$0xff]
        %v633 = vld [vmem:[#allocation2 + $0x300] sm:$0xff]
        %v634 = vld [vmem:[#allocation2 + $0x308] sm:$0xff]
        %v635 = vld [vmem:[#allocation2 + $0x310] sm:$0xff]
        %v636 = vld [vmem:[#allocation2 + $0x318] sm:$0xff]
        %v637 = vld [vmem:[#allocation2 + $0x320] sm:$0xff]
        %v638 = vld [vmem:[#allocation2 + $0x328] sm:$0xff]
        %v639 = vld [vmem:[#allocation2 + $0x330] sm:$0xff]
        %v640 = vld [vmem:[#allocation2 + $0x338] sm:$0xff]
        %v641 = vld [vmem:[#allocation2 + $0x340] sm:$0xff]
        %v642 = vld [vmem:[#allocation2 + $0x348] sm:$0xff]
        %v643 = vld [vmem:[#allocation2 + $0x350] sm:$0xff]
        %v644 = vld [vmem:[#allocation2 + $0x358] sm:$0xff]
        %v645 = vld [vmem:[#allocation2 + $0x360] sm:$0xff]
        %v646 = vld [vmem:[#allocation2 + $0x368] sm:$0xff]
        %v647 = vld [vmem:[#allocation2 + $0x370] sm:$0xff]
        %v648 = vld [vmem:[#allocation2 + $0x378] sm:$0xff]
        %v649 = vld [vmem:[#allocation2 + $0x380] sm:$0xff]
        %v650 = vld [vmem:[#allocation2 + $0x388] sm:$0xff]
        %v651 = vld [vmem:[#allocation2 + $0x390] sm:$0xff]
        %v652 = vld [vmem:[#allocation2 + $0x398] sm:$0xff]
        %v653 = vld [vmem:[#allocation2 + $0x3a0] sm:$0xff]
        %v654 = vld [vmem:[#allocation2 + $0x3a8] sm:$0xff]
        %v655 = vld [vmem:[#allocation2 + $0x3b0] sm:$0xff]
        %v656 = vld [vmem:[#allocation2 + $0x3b8] sm:$0xff]
        %v657 = vld [vmem:[#allocation2 + $0x3c0] sm:$0xff]
        %v658 = vld [vmem:[#allocation2 + $0x3c8] sm:$0xff]
        %v659 = vld [vmem:[#allocation2 + $0x3d0] sm:$0xff]
        %v660 = vld [vmem:[#allocation2 + $0x3d8] sm:$0xff]
        %v661 = vld [vmem:[#allocation2 + $0x3e0] sm:$0xff]
        %v662 = vld [vmem:[#allocation2 + $0x3e8] sm:$0xff]
        %v663 = vld [vmem:[#allocation2 + $0x3f0] sm:$0xff]
        %v664 = vld [vmem:[#allocation2 + $0x3f8] sm:$0xff]
        %v665 = vld [vmem:[#allocation2 + $0x400] sm:$0xff]
        %v666 = vld [vmem:[#allocation2 + $0x408] sm:$0xff]
        %v667 = vld [vmem:[#allocation2 + $0x410] sm:$0xff]
        %v668 = vld [vmem:[#allocation2 + $0x418] sm:$0xff]
        %v669 = vld [vmem:[#allocation2 + $0x420] sm:$0xff]
        %v670 = vld [vmem:[#allocation2 + $0x428] sm:$0xff]
        %v671 = vld [vmem:[#allocation2 + $0x430] sm:$0xff]
        %v672 = vld [vmem:[#allocation2 + $0x438] sm:$0xff]
        %v673 = vld [vmem:[#allocation2 + $0x440] sm:$0xff]
        %v674 = vld [vmem:[#allocation2 + $0x448] sm:$0xff]
        %v675 = vld [vmem:[#allocation2 + $0x450] sm:$0xff]
        %v676 = vld [vmem:[#allocation2 + $0x458] sm:$0xff]
        %v677 = vld [vmem:[#allocation2 + $0x460] sm:$0xff]
        %v678 = vld [vmem:[#allocation2 + $0x468] sm:$0xff]
        %v679 = vld [vmem:[#allocation2 + $0x470] sm:$0xff]
        %v680 = vld [vmem:[#allocation2 + $0x478] sm:$0xff]
        %v681 = vld [vmem:[#allocation2 + $0x480] sm:$0xff]
        %v682 = vld [vmem:[#allocation2 + $0x488] sm:$0xff]
        %v683 = vld [vmem:[#allocation2 + $0x490] sm:$0xff]
        %v684 = vld [vmem:[#allocation2 + $0x498] sm:$0xff]
        %v685 = vld [vmem:[#allocation2 + $0x4a0] sm:$0xff]
        %v686 = vld [vmem:[#allocation2 + $0x4a8] sm:$0xff]
        %v687 = vld [vmem:[#allocation2 + $0x4b0] sm:$0xff]
        %v688 = vld [vmem:[#allocation2 + $0x4b8] sm:$0xff]
        %v689 = vld [vmem:[#allocation2 + $0x4c0] sm:$0xff]
        %v690 = vld [vmem:[#allocation2 + $0x4c8] sm:$0xff]
        %v691 = vld [vmem:[#allocation2 + $0x4d0] sm:$0xff]
        %v692 = vld [vmem:[#allocation2 + $0x4d8] sm:$0xff]
        %v693 = vld [vmem:[#allocation2 + $0x4e0] sm:$0xff]
        %v694 = vld [vmem:[#allocation2 + $0x4e8] sm:$0xff]
        %v695 = vld [vmem:[#allocation2 + $0x4f0] sm:$0xff]
        %v696 = vld [vmem:[#allocation2 + $0x4f8] sm:$0xff]
        %v697 = vld [vmem:[#allocation2 + $0x500] sm:$0xff]
        %v698 = vld [vmem:[#allocation2 + $0x508] sm:$0xff]
        %v699 = vld [vmem:[#allocation2 + $0x510] sm:$0xff]
        %v700 = vld [vmem:[#allocation2 + $0x518] sm:$0xff]
        %v701 = vld [vmem:[#allocation2 + $0x520] sm:$0xff]
        %v702 = vld [vmem:[#allocation2 + $0x528] sm:$0xff]
        %v703 = vld [vmem:[#allocation2 + $0x530] sm:$0xff]
        %v704 = vld [vmem:[#allocation2 + $0x538] sm:$0xff]
        %v705 = vld [vmem:[#allocation2 + $0x540] sm:$0xff]
        %v706 = vld [vmem:[#allocation2 + $0x548] sm:$0xff]
        %v707 = vld [vmem:[#allocation2 + $0x550] sm:$0xff]
        %v708 = vld [vmem:[#allocation2 + $0x558] sm:$0xff]
        %v709 = vld [vmem:[#allocation2 + $0x560] sm:$0xff]
        %v710 = vld [vmem:[#allocation2 + $0x568] sm:$0xff]
        %v711 = vld [vmem:[#allocation2 + $0x570] sm:$0xff]
        %v712 = vld [vmem:[#allocation2 + $0x578] sm:$0xff]
        %v713 = vld [vmem:[#allocation2 + $0x580] sm:$0xff]
        %v714 = vld [vmem:[#allocation2 + $0x588] sm:$0xff]
        %v715 = vld [vmem:[#allocation2 + $0x590] sm:$0xff]
        %v716 = vld [vmem:[#allocation2 + $0x598] sm:$0xff]
        %v717 = vld [vmem:[#allocation2 + $0x5a0] sm:$0xff]
        %v718 = vld [vmem:[#allocation2 + $0x5a8] sm:$0xff]
        %v719 = vld [vmem:[#allocation2 + $0x5b0] sm:$0xff]
        %v720 = vld [vmem:[#allocation2 + $0x5b8] sm:$0xff]
        %v721 = vld [vmem:[#allocation2 + $0x5c0] sm:$0xff]
        %v722 = vld [vmem:[#allocation2 + $0x5c8] sm:$0xff]
        %v723 = vld [vmem:[#allocation2 + $0x5d0] sm:$0xff]
        %v724 = vld [vmem:[#allocation2 + $0x5d8] sm:$0xff]
        %v725 = vld [vmem:[#allocation2 + $0x5e0] sm:$0xff]
        %v726 = vld [vmem:[#allocation2 + $0x5e8] sm:$0xff]
        %v727 = vld [vmem:[#allocation2 + $0x5f0] sm:$0xff]
        %v728 = vld [vmem:[#allocation2 + $0x5f8] sm:$0xff]
        %v729 = vld [vmem:[#allocation2 + $0x600] sm:$0xff]
        %v730 = vld [vmem:[#allocation2 + $0x608] sm:$0xff]
        %v731 = vld [vmem:[#allocation2 + $0x610] sm:$0xff]
        %v732 = vld [vmem:[#allocation2 + $0x618] sm:$0xff]
        %v733 = vld [vmem:[#allocation2 + $0x620] sm:$0xff]
        %v734 = vld [vmem:[#allocation2 + $0x628] sm:$0xff]
        %v735 = vld [vmem:[#allocation2 + $0x630] sm:$0xff]
        %v736 = vld [vmem:[#allocation2 + $0x638] sm:$0xff]
        %v737 = vld [vmem:[#allocation2 + $0x640] sm:$0xff]
        %v738 = vld [vmem:[#allocation2 + $0x648] sm:$0xff]
        %v739 = vld [vmem:[#allocation2 + $0x650] sm:$0xff]
        %v740 = vld [vmem:[#allocation2 + $0x658] sm:$0xff]
        %v741 = vld [vmem:[#allocation2 + $0x660] sm:$0xff]
        %v742 = vld [vmem:[#allocation2 + $0x668] sm:$0xff]
        %v743 = vld [vmem:[#allocation2 + $0x670] sm:$0xff]
        %v744 = vld [vmem:[#allocation2 + $0x678] sm:$0xff]
        %v745 = vld [vmem:[#allocation2 + $0x680] sm:$0xff]
        %v746 = vld [vmem:[#allocation2 + $0x688] sm:$0xff]
        %v747 = vld [vmem:[#allocation2 + $0x690] sm:$0xff]
        %v748 = vld [vmem:[#allocation2 + $0x698] sm:$0xff]
        %v749 = vld [vmem:[#allocation2 + $0x6a0] sm:$0xff]
        %v750 = vld [vmem:[#allocation2 + $0x6a8] sm:$0xff]
        %v751 = vld [vmem:[#allocation2 + $0x6b0] sm:$0xff]
        %v752 = vld [vmem:[#allocation2 + $0x6b8] sm:$0xff]
        %v753 = vld [vmem:[#allocation2 + $0x6c0] sm:$0xff]
        %v754 = vld [vmem:[#allocation2 + $0x6c8] sm:$0xff]
        %v755 = vld [vmem:[#allocation2 + $0x6d0] sm:$0xff]
        %v756 = vld [vmem:[#allocation2 + $0x6d8] sm:$0xff]
        %v757 = vld [vmem:[#allocation2 + $0x6e0] sm:$0xff]
        %v758 = vld [vmem:[#allocation2 + $0x6e8] sm:$0xff]
        %v759 = vld [vmem:[#allocation2 + $0x6f0] sm:$0xff]
        %v760 = vld [vmem:[#allocation2 + $0x6f8] sm:$0xff]
        %v761 = vld [vmem:[#allocation2 + $0x700] sm:$0xff]
        %v762 = vld [vmem:[#allocation2 + $0x708] sm:$0xff]
        %v763 = vld [vmem:[#allocation2 + $0x710] sm:$0xff]
        %v764 = vld [vmem:[#allocation2 + $0x718] sm:$0xff]
        %v765 = vld [vmem:[#allocation2 + $0x720] sm:$0xff]
        %v766 = vld [vmem:[#allocation2 + $0x728] sm:$0xff]
        %v767 = vld [vmem:[#allocation2 + $0x730] sm:$0xff]
        %v768 = vld [vmem:[#allocation2 + $0x738] sm:$0xff]
        %v769 = vld [vmem:[#allocation2 + $0x740] sm:$0xff]
        %v770 = vld [vmem:[#allocation2 + $0x748] sm:$0xff]
        %v771 = vld [vmem:[#allocation2 + $0x750] sm:$0xff]
        %v772 = vld [vmem:[#allocation2 + $0x758] sm:$0xff]
        %v773 = vld [vmem:[#allocation2 + $0x760] sm:$0xff]
        %v774 = vld [vmem:[#allocation2 + $0x768] sm:$0xff]
        %v775 = vld [vmem:[#allocation2 + $0x770] sm:$0xff]
        %v776 = vld [vmem:[#allocation2 + $0x778] sm:$0xff]
        %v777 = vld [vmem:[#allocation2 + $0x780] sm:$0xff]
        %v778 = vld [vmem:[#allocation2 + $0x788] sm:$0xff]
        %v779 = vld [vmem:[#allocation2 + $0x790] sm:$0xff]
        %v780 = vld [vmem:[#allocation2 + $0x798] sm:$0xff]
        %v781 = vld [vmem:[#allocation2 + $0x7a0] sm:$0xff]
        %v782 = vld [vmem:[#allocation2 + $0x7a8] sm:$0xff]
        %v783 = vld [vmem:[#allocation2 + $0x7b0] sm:$0xff]
        %v784 = vld [vmem:[#allocation2 + $0x7b8] sm:$0xff]
        %v785 = vld [vmem:[#allocation2 + $0x7c0] sm:$0xff]
        %v786 = vld [vmem:[#allocation2 + $0x7c8] sm:$0xff]
        %v787 = vld [vmem:[#allocation2 + $0x7d0] sm:$0xff]
        %v788 = vld [vmem:[#allocation2 + $0x7d8] sm:$0xff]
        %v789 = vld [vmem:[#allocation2 + $0x7e0] sm:$0xff]
        %v790 = vld [vmem:[#allocation2 + $0x7e8] sm:$0xff]
        %v791 = vld [vmem:[#allocation2 + $0x7f0] sm:$0xff]
        %v792 = vld [vmem:[#allocation2 + $0x7f8] sm:$0xff]
        %v794 = vrot.slane %v535, 4
        %v797 = vrot.slane %v536, 4
        %799 = vmatprep.subr.mxu0 %v538
        %800 = vmatpush1.msra.mxu0 %v537
        %801 = vmatprep.subr.mxu0 %v542
        %802 = vmatpush1.msra.mxu0 %v541
        %803 = vmatprep.subr.mxu0 %v546
        %804 = vmatpush1.msra.mxu0 %v545
        %805 = vmatprep.subr.mxu0 %v550
        %806 = vmatpush1.msra.mxu0 %v549
        %807 = vmatprep.subr.mxu0 %v554
        %808 = vmatpush1.msra.mxu0 %v553
        %809 = vmatprep.subr.mxu0 %v558
        %810 = vmatpush1.msra.mxu0 %v557
        %811 = vmatprep.subr.mxu0 %v562
        %812 = vmatpush1.msra.mxu0 %v561
        %813 = vmatprep.subr.mxu0 %v566
        %814 = vmatpush1.msra.mxu0 %v565
        %815 = vmatprep.subr.mxu0 %v570
        %816 = vmatpush1.msra.mxu0 %v569
        %817 = vmatprep.subr.mxu0 %v574
        %818 = vmatpush1.msra.mxu0 %v573
        %819 = vmatprep.subr.mxu0 %v578
        %820 = vmatpush1.msra.mxu0 %v577
        %821 = vmatprep.subr.mxu0 %v582
        %822 = vmatpush1.msra.mxu0 %v581
        %823 = vmatprep.subr.mxu0 %v586
        %824 = vmatpush1.msra.mxu0 %v585
        %825 = vmatprep.subr.mxu0 %v590
        %826 = vmatpush1.msra.mxu0 %v589
        %827 = vmatprep.subr.mxu0 %v594
        %828 = vmatpush1.msra.mxu0 %v593
        %829 = vmatprep.subr.mxu0 %v598
        %830 = vmatpush1.msra.mxu0 %v597
        %831 = vmatprep.subr.mxu0 %v602
        %832 = vmatpush1.msra.mxu0 %v601
        %833 = vmatprep.subr.mxu0 %v606
        %834 = vmatpush1.msra.mxu0 %v605
        %835 = vmatprep.subr.mxu0 %v610
        %836 = vmatpush1.msra.mxu0 %v609
        %837 = vmatprep.subr.mxu0 %v614
        %838 = vmatpush1.msra.mxu0 %v613
        %839 = vmatprep.subr.mxu0 %v618
        %840 = vmatpush1.msra.mxu0 %v617
        %841 = vmatprep.subr.mxu0 %v622
        %842 = vmatpush1.msra.mxu0 %v621
        %843 = vmatprep.subr.mxu0 %v626
        %844 = vmatpush1.msra.mxu0 %v625
        %845 = vmatprep.subr.mxu0 %v630
        %846 = vmatpush1.msra.mxu0 %v629
        %847 = vmatprep.subr.mxu0 %v634
        %848 = vmatpush1.msra.mxu0 %v633
        %849 = vmatprep.subr.mxu0 %v638
        %850 = vmatpush1.msra.mxu0 %v637
        %851 = vmatprep.subr.mxu0 %v642
        %852 = vmatpush1.msra.mxu0 %v641
        %853 = vmatprep.subr.mxu0 %v646
        %854 = vmatpush1.msra.mxu0 %v645
        %855 = vmatprep.subr.mxu0 %v650
        %856 = vmatpush1.msra.mxu0 %v649
        %857 = vmatprep.subr.mxu0 %v654
        %858 = vmatpush1.msra.mxu0 %v653
        %859 = vmatprep.subr.mxu0 %v658
        %860 = vmatpush1.msra.mxu0 %v657
        %861 = vmatprep.subr.mxu0 %v662
        %862 = vmatpush1.msra.mxu0 %v661
        %863 = vmatprep.mubr.f32.mxu0 %v794
        %864 = vmatmul.mubr.f32.gmra.mrb[0].mxu0 %v535
        %v865 = vpop.f32.mrb[0].mxu0
        %v866 = vadd.f32 0.0, %v865
        %v867 = vpop.f32.mrb[0].mxu0
        %v868 = vadd.f32 0.0, %v867
        %869 = vdwg.mxu0
        %870 = vmatprep.subr.mxu0 %v666
        %871 = vmatpush1.msra.mxu0 %v665
        %872 = vmatprep.subr.mxu0 %v670
        %873 = vmatpush1.msra.mxu0 %v669
        %874 = vmatprep.subr.mxu0 %v674
        %875 = vmatpush1.msra.mxu0 %v673
        %876 = vmatprep.subr.mxu0 %v678
        %877 = vmatpush1.msra.mxu0 %v677
        %878 = vmatprep.subr.mxu0 %v682
        %879 = vmatpush1.msra.mxu0 %v681
        %880 = vmatprep.subr.mxu0 %v686
        %881 = vmatpush1.msra.mxu0 %v685
        %882 = vmatprep.subr.mxu0 %v690
        %883 = vmatpush1.msra.mxu0 %v689
        %884 = vmatprep.subr.mxu0 %v694
        %885 = vmatpush1.msra.mxu0 %v693
        %886 = vmatprep.subr.mxu0 %v698
        %887 = vmatpush1.msra.mxu0 %v697
        %888 = vmatprep.subr.mxu0 %v702
        %889 = vmatpush1.msra.mxu0 %v701
        %890 = vmatprep.subr.mxu0 %v706
        %891 = vmatpush1.msra.mxu0 %v705
        %892 = vmatprep.subr.mxu0 %v710
        %893 = vmatpush1.msra.mxu0 %v709
        %894 = vmatprep.subr.mxu0 %v714
        %895 = vmatpush1.msra.mxu0 %v713
        %896 = vmatprep.subr.mxu0 %v718
        %897 = vmatpush1.msra.mxu0 %v717
        %898 = vmatprep.subr.mxu0 %v722
        %899 = vmatpush1.msra.mxu0 %v721
        %900 = vmatprep.subr.mxu0 %v726
        %901 = vmatpush1.msra.mxu0 %v725
        %902 = vmatprep.subr.mxu0 %v730
        %903 = vmatpush1.msra.mxu0 %v729
        %904 = vmatprep.subr.mxu0 %v734
        %905 = vmatpush1.msra.mxu0 %v733
        %906 = vmatprep.subr.mxu0 %v738
        %907 = vmatpush1.msra.mxu0 %v737
        %908 = vmatprep.subr.mxu0 %v742
        %909 = vmatpush1.msra.mxu0 %v741
        %910 = vmatprep.subr.mxu0 %v746
        %911 = vmatpush1.msra.mxu0 %v745
        %912 = vmatprep.subr.mxu0 %v750
        %913 = vmatpush1.msra.mxu0 %v749
        %914 = vmatprep.subr.mxu0 %v754
        %915 = vmatpush1.msra.mxu0 %v753
        %916 = vmatprep.subr.mxu0 %v758
        %917 = vmatpush1.msra.mxu0 %v757
        %918 = vmatprep.subr.mxu0 %v762
        %919 = vmatpush1.msra.mxu0 %v761
        %920 = vmatprep.subr.mxu0 %v766
        %921 = vmatpush1.msra.mxu0 %v765
        %922 = vmatprep.subr.mxu0 %v770
        %923 = vmatpush1.msra.mxu0 %v769
        %924 = vmatprep.subr.mxu0 %v774
        %925 = vmatpush1.msra.mxu0 %v773
        %926 = vmatprep.subr.mxu0 %v778
        %927 = vmatpush1.msra.mxu0 %v777
        %928 = vmatprep.subr.mxu0 %v782
        %929 = vmatpush1.msra.mxu0 %v781
        %930 = vmatprep.subr.mxu0 %v786
        %931 = vmatpush1.msra.mxu0 %v785
        %932 = vmatprep.subr.mxu0 %v790
        %933 = vmatpush1.msra.mxu0 %v789
        %934 = vmatprep.mubr.f32.mxu0 %v797
        %935 = vmatmul.mubr.f32.gmra.mrb[0].mxu0 %v536
        %v936 = vpop.f32.mrb[0].mxu0
        %v937 = vadd.f32 %v866, %v936
        %v938 = vpop.f32.mrb[0].mxu0
        %v939 = vadd.f32 %v868, %v938
        %940 = vdwg.mxu0
        %941 = vmatprep.subr.mxu0 %v540
        %942 = vmatpush1.msra.mxu0 %v539
        %943 = vmatprep.subr.mxu0 %v544
        %944 = vmatpush1.msra.mxu0 %v543
        %945 = vmatprep.subr.mxu0 %v548
        %946 = vmatpush1.msra.mxu0 %v547
        %947 = vmatprep.subr.mxu0 %v552
        %948 = vmatpush1.msra.mxu0 %v551
        %949 = vmatprep.subr.mxu0 %v556
        %950 = vmatpush1.msra.mxu0 %v555
        %951 = vmatprep.subr.mxu0 %v560
        %952 = vmatpush1.msra.mxu0 %v559
        %953 = vmatprep.subr.mxu0 %v564
        %954 = vmatpush1.msra.mxu0 %v563
        %955 = vmatprep.subr.mxu0 %v568
        %956 = vmatpush1.msra.mxu0 %v567
        %957 = vmatprep.subr.mxu0 %v572
        %958 = vmatpush1.msra.mxu0 %v571
        %959 = vmatprep.subr.mxu0 %v576
        %960 = vmatpush1.msra.mxu0 %v575
        %961 = vmatprep.subr.mxu0 %v580
        %962 = vmatpush1.msra.mxu0 %v579
        %963 = vmatprep.subr.mxu0 %v584
        %964 = vmatpush1.msra.mxu0 %v583
        %965 = vmatprep.subr.mxu0 %v588
        %966 = vmatpush1.msra.mxu0 %v587
        %967 = vmatprep.subr.mxu0 %v592
        %968 = vmatpush1.msra.mxu0 %v591
        %969 = vmatprep.subr.mxu0 %v596
        %970 = vmatpush1.msra.mxu0 %v595
        %971 = vmatprep.subr.mxu0 %v600
        %972 = vmatpush1.msra.mxu0 %v599
        %973 = vmatprep.subr.mxu0 %v604
        %974 = vmatpush1.msra.mxu0 %v603
        %975 = vmatprep.subr.mxu0 %v608
        %976 = vmatpush1.msra.mxu0 %v607
        %977 = vmatprep.subr.mxu0 %v612
        %978 = vmatpush1.msra.mxu0 %v611
        %979 = vmatprep.subr.mxu0 %v616
        %980 = vmatpush1.msra.mxu0 %v615
        %981 = vmatprep.subr.mxu0 %v620
        %982 = vmatpush1.msra.mxu0 %v619
        %983 = vmatprep.subr.mxu0 %v624
        %984 = vmatpush1.msra.mxu0 %v623
        %985 = vmatprep.subr.mxu0 %v628
        %986 = vmatpush1.msra.mxu0 %v627
        %987 = vmatprep.subr.mxu0 %v632
        %988 = vmatpush1.msra.mxu0 %v631
        %989 = vmatprep.subr.mxu0 %v636
        %990 = vmatpush1.msra.mxu0 %v635
        %991 = vmatprep.subr.mxu0 %v640
        %992 = vmatpush1.msra.mxu0 %v639
        %993 = vmatprep.subr.mxu0 %v644
        %994 = vmatpush1.msra.mxu0 %v643
        %995 = vmatprep.subr.mxu0 %v648
        %996 = vmatpush1.msra.mxu0 %v647
        %997 = vmatprep.subr.mxu0 %v652
        %998 = vmatpush1.msra.mxu0 %v651
        %999 = vmatprep.subr.mxu0 %v656
        %1000 = vmatpush1.msra.mxu0 %v655
        %1001 = vmatprep.subr.mxu0 %v660
        %1002 = vmatpush1.msra.mxu0 %v659
        %1003 = vmatprep.subr.mxu0 %v664
        %1004 = vmatpush1.msra.mxu0 %v663
        %1005 = vmatprep.mubr.f32.mxu0 %v794
        %1006 = vmatmul.mubr.f32.gmra.mrb[0].mxu0 %v535
        %v1007 = vpop.f32.mrb[0].mxu0
        %v1008 = vadd.f32 0.0, %v1007
        %v1009 = vpop.f32.mrb[0].mxu0
        %v1010 = vadd.f32 0.0, %v1009
        %1011 = vdwg.mxu0
        %1012 = vmatprep.subr.mxu0 %v668
        %1013 = vmatpush1.msra.mxu0 %v667
        %1014 = vmatprep.subr.mxu0 %v672
        %1015 = vmatpush1.msra.mxu0 %v671
        %1016 = vmatprep.subr.mxu0 %v676
        %1017 = vmatpush1.msra.mxu0 %v675
        %1018 = vmatprep.subr.mxu0 %v680
        %1019 = vmatpush1.msra.mxu0 %v679
        %1020 = vmatprep.subr.mxu0 %v684
        %1021 = vmatpush1.msra.mxu0 %v683
        %1022 = vmatprep.subr.mxu0 %v688
        %1023 = vmatpush1.msra.mxu0 %v687
        %1024 = vmatprep.subr.mxu0 %v692
        %1025 = vmatpush1.msra.mxu0 %v691
        %1026 = vmatprep.subr.mxu0 %v696
        %1027 = vmatpush1.msra.mxu0 %v695
        %1028 = vmatprep.subr.mxu0 %v700
        %1029 = vmatpush1.msra.mxu0 %v699
        %1030 = vmatprep.subr.mxu0 %v704
        %1031 = vmatpush1.msra.mxu0 %v703
        %1032 = vmatprep.subr.mxu0 %v708
        %1033 = vmatpush1.msra.mxu0 %v707
        %1034 = vmatprep.subr.mxu0 %v712
        %1035 = vmatpush1.msra.mxu0 %v711
        %1036 = vmatprep.subr.mxu0 %v716
        %1037 = vmatpush1.msra.mxu0 %v715
        %1038 = vmatprep.subr.mxu0 %v720
        %1039 = vmatpush1.msra.mxu0 %v719
        %1040 = vmatprep.subr.mxu0 %v724
        %1041 = vmatpush1.msra.mxu0 %v723
        %1042 = vmatprep.subr.mxu0 %v728
        %1043 = vmatpush1.msra.mxu0 %v727
        %1044 = vmatprep.subr.mxu0 %v732
        %1045 = vmatpush1.msra.mxu0 %v731
        %1046 = vmatprep.subr.mxu0 %v736
        %1047 = vmatpush1.msra.mxu0 %v735
        %1048 = vmatprep.subr.mxu0 %v740
        %1049 = vmatpush1.msra.mxu0 %v739
        %1050 = vmatprep.subr.mxu0 %v744
        %1051 = vmatpush1.msra.mxu0 %v743
        %1052 = vmatprep.subr.mxu0 %v748
        %1053 = vmatpush1.msra.mxu0 %v747
        %1054 = vmatprep.subr.mxu0 %v752
        %1055 = vmatpush1.msra.mxu0 %v751
        %1056 = vmatprep.subr.mxu0 %v756
        %1057 = vmatpush1.msra.mxu0 %v755
        %1058 = vmatprep.subr.mxu0 %v760
        %1059 = vmatpush1.msra.mxu0 %v759
        %1060 = vmatprep.subr.mxu0 %v764
        %1061 = vmatpush1.msra.mxu0 %v763
        %1062 = vmatprep.subr.mxu0 %v768
        %1063 = vmatpush1.msra.mxu0 %v767
        %1064 = vmatprep.subr.mxu0 %v772
        %1065 = vmatpush1.msra.mxu0 %v771
        %1066 = vmatprep.subr.mxu0 %v776
        %1067 = vmatpush1.msra.mxu0 %v775
        %1068 = vmatprep.subr.mxu0 %v780
        %1069 = vmatpush1.msra.mxu0 %v779
        %1070 = vmatprep.subr.mxu0 %v784
        %1071 = vmatpush1.msra.mxu0 %v783
        %1072 = vmatprep.subr.mxu0 %v788
        %1073 = vmatpush1.msra.mxu0 %v787
        %1074 = vmatprep.subr.mxu0 %v792
        %1075 = vmatpush1.msra.mxu0 %v791
        %1076 = vmatprep.mubr.f32.mxu0 %v797
        %1077 = vmatmul.mubr.f32.gmra.mrb[0].mxu0 %v536
        %v1078 = vpop.f32.mrb[0].mxu0
        %v1079 = vadd.f32 %v1008, %v1078
        %v1080 = vpop.f32.mrb[0].mxu0
        %v1081 = vadd.f32 %v1010, %v1080
        %1082 = vdwg.mxu0
        %v1085 = vunpack.c.l.s4 1966171168
        %v1086 = vunpack.c.0.s8 %v1085
        %v1087 = vlaneseq
        %v1088 = vshrl.u32 %v1087, 7
        %v1089 = vsub.s32 %v1086, %v1088
        %v1090 = vrot.slane %v937, %v1089
        %v1091 = vcombine.high %v1090, %v1090
        %v1093 = vunpack.c.l.s4 1966171168
        %v1094 = vunpack.c.0.s8 %v1093
        %v1095 = vlaneseq
        %v1096 = vshrl.u32 %v1095, 7
        %v1097 = vsub.s32 %v1094, %v1096
        %v1098 = vrot.slane %v1090, %v1097
        %v1100 = vunpack.c.l.s4 1966171168
        %v1101 = vunpack.c.0.s8 %v1100
        %v1102 = vlaneseq
        %v1103 = vshrl.u32 %v1102, 7
        %v1104 = vsub.s32 %v1101, %v1103
        %v1105 = vrot.slane %v1091, %v1104
        %v1106 = vcombine.high %v1098, %v1098
        %v1107 = vcombine.high %v1105, %v1105
        %vm1112 = vcmask 516096
        %1113 = vst.msk [vmem:[%s300] sm:$0x1] %vm1112, %v1098
        %1114 = vst.msk [vmem:[%s300 + $0x8] sm:$0x1] %vm1112, %v1105
        %1115 = vst.msk [vmem:[%s300 + $0x10] sm:$0x1] %vm1112, %v1106
        %1116 = vst.msk [vmem:[%s300 + $0x18] sm:$0x1] %vm1112, %v1107
        %v1117 = vlaneseq
        %v1118 = vshrl.u32 %v1117, 7
        %v1119 = vsub.s32 0, %v1118
        %v1120 = vrot.slane %v1098, %v1119
        %v1121 = vlaneseq
        %v1122 = vshrl.u32 %v1121, 7
        %v1123 = vsub.s32 0, %v1122
        %v1124 = vrot.slane %v1105, %v1123
        %v1125 = vlaneseq
        %v1126 = vshrl.u32 %v1125, 7
        %v1127 = vsub.s32 0, %v1126
        %v1128 = vrot.slane %v1106, %v1127
        %v1129 = vlaneseq
        %v1130 = vshrl.u32 %v1129, 7
        %v1131 = vsub.s32 0, %v1130
        %v1132 = vrot.slane %v1107, %v1131
        %1133 = vrot.lane.b32.xlu0 %v1120, 64
        %v1134 = vpop.permute.xlu0 %1133
        %1135 = vrot.lane.b32.xlu0 %v1124, 64
        %v1136 = vpop.permute.xlu0 %1135
        %1137 = vrot.lane.b32.xlu0 %v1128, 64
        %v1138 = vpop.permute.xlu0 %1137
        %1139 = vrot.lane.b32.xlu0 %v1132, 64
        %v1140 = vpop.permute.xlu0 %1139
        %1145 = vst.msk [vmem:[%s300 + $0x1] sm:$0x1] %vm1112, %v1134
        %1146 = vst.msk [vmem:[%s300 + $0x9] sm:$0x1] %vm1112, %v1136
        %1147 = vst.msk [vmem:[%s300 + $0x11] sm:$0x1] %vm1112, %v1138
        %1148 = vst.msk [vmem:[%s300 + $0x19] sm:$0x1] %vm1112, %v1140
        %v1151 = vunpack.c.l.s4 1966171168
        %v1152 = vunpack.c.0.s8 %v1151
        %v1153 = vlaneseq
        %v1154 = vshrl.u32 %v1153, 7
        %v1155 = vsub.s32 %v1152, %v1154
        %v1156 = vrot.slane %v939, %v1155
        %v1157 = vcombine.high %v1156, %v1156
        %v1159 = vunpack.c.l.s4 1966171168
        %v1160 = vunpack.c.0.s8 %v1159
        %v1161 = vlaneseq
        %v1162 = vshrl.u32 %v1161, 7
        %v1163 = vsub.s32 %v1160, %v1162
        %v1164 = vrot.slane %v1156, %v1163
        %v1166 = vunpack.c.l.s4 1966171168
        %v1167 = vunpack.c.0.s8 %v1166
        %v1168 = vlaneseq
        %v1169 = vshrl.u32 %v1168, 7
        %v1170 = vsub.s32 %v1167, %v1169
        %v1171 = vrot.slane %v1157, %v1170
        %v1172 = vcombine.high %v1164, %v1164
        %v1173 = vcombine.high %v1171, %v1171
        %1178 = vst.msk [vmem:[%s300 + $0x2] sm:$0x1] %vm1112, %v1164
        %1179 = vst.msk [vmem:[%s300 + $0xa] sm:$0x1] %vm1112, %v1171
        %1180 = vst.msk [vmem:[%s300 + $0x12] sm:$0x1] %vm1112, %v1172
        %1181 = vst.msk [vmem:[%s300 + $0x1a] sm:$0x1] %vm1112, %v1173
        %v1182 = vlaneseq
        %v1183 = vshrl.u32 %v1182, 7
        %v1184 = vsub.s32 0, %v1183
        %v1185 = vrot.slane %v1164, %v1184
        %v1186 = vlaneseq
        %v1187 = vshrl.u32 %v1186, 7
        %v1188 = vsub.s32 0, %v1187
        %v1189 = vrot.slane %v1171, %v1188
        %v1190 = vlaneseq
        %v1191 = vshrl.u32 %v1190, 7
        %v1192 = vsub.s32 0, %v1191
        %v1193 = vrot.slane %v1172, %v1192
        %v1194 = vlaneseq
        %v1195 = vshrl.u32 %v1194, 7
        %v1196 = vsub.s32 0, %v1195
        %v1197 = vrot.slane %v1173, %v1196
        %1198 = vrot.lane.b32.xlu0 %v1185, 64
        %v1199 = vpop.permute.xlu0 %1198
        %1200 = vrot.lane.b32.xlu0 %v1189, 64
        %v1201 = vpop.permute.xlu0 %1200
        %1202 = vrot.lane.b32.xlu0 %v1193, 64
        %v1203 = vpop.permute.xlu0 %1202
        %1204 = vrot.lane.b32.xlu0 %v1197, 64
        %v1205 = vpop.permute.xlu0 %1204
        %1210 = vst.msk [vmem:[%s300 + $0x3] sm:$0x1] %vm1112, %v1199
        %1211 = vst.msk [vmem:[%s300 + $0xb] sm:$0x1] %vm1112, %v1201
        %1212 = vst.msk [vmem:[%s300 + $0x13] sm:$0x1] %vm1112, %v1203
        %1213 = vst.msk [vmem:[%s300 + $0x1b] sm:$0x1] %vm1112, %v1205
        %v1216 = vunpack.c.l.s4 1966171168
        %v1217 = vunpack.c.0.s8 %v1216
        %v1218 = vlaneseq
        %v1219 = vshrl.u32 %v1218, 7
        %v1220 = vsub.s32 %v1217, %v1219
        %v1221 = vrot.slane %v1079, %v1220
        %v1222 = vcombine.high %v1221, %v1221
        %v1224 = vunpack.c.l.s4 1966171168
        %v1225 = vunpack.c.0.s8 %v1224
        %v1226 = vlaneseq
        %v1227 = vshrl.u32 %v1226, 7
        %v1228 = vsub.s32 %v1225, %v1227
        %v1229 = vrot.slane %v1221, %v1228
        %v1231 = vunpack.c.l.s4 1966171168
        %v1232 = vunpack.c.0.s8 %v1231
        %v1233 = vlaneseq
        %v1234 = vshrl.u32 %v1233, 7
        %v1235 = vsub.s32 %v1232, %v1234
        %v1236 = vrot.slane %v1222, %v1235
        %v1237 = vcombine.high %v1229, %v1229
        %v1238 = vcombine.high %v1236, %v1236
        %1243 = vst.msk [vmem:[%s300 + $0x4] sm:$0x1] %vm1112, %v1229
        %1244 = vst.msk [vmem:[%s300 + $0xc] sm:$0x1] %vm1112, %v1236
        %1245 = vst.msk [vmem:[%s300 + $0x14] sm:$0x1] %vm1112, %v1237
        %1246 = vst.msk [vmem:[%s300 + $0x1c] sm:$0x1] %vm1112, %v1238
        %v1247 = vlaneseq
        %v1248 = vshrl.u32 %v1247, 7
        %v1249 = vsub.s32 0, %v1248
        %v1250 = vrot.slane %v1229, %v1249
        %v1251 = vlaneseq
        %v1252 = vshrl.u32 %v1251, 7
        %v1253 = vsub.s32 0, %v1252
        %v1254 = vrot.slane %v1236, %v1253
        %v1255 = vlaneseq
        %v1256 = vshrl.u32 %v1255, 7
        %v1257 = vsub.s32 0, %v1256
        %v1258 = vrot.slane %v1237, %v1257
        %v1259 = vlaneseq
        %v1260 = vshrl.u32 %v1259, 7
        %v1261 = vsub.s32 0, %v1260
        %v1262 = vrot.slane %v1238, %v1261
        %1263 = vrot.lane.b32.xlu0 %v1250, 64
        %v1264 = vpop.permute.xlu0 %1263
        %1265 = vrot.lane.b32.xlu0 %v1254, 64
        %v1266 = vpop.permute.xlu0 %1265
        %1267 = vrot.lane.b32.xlu0 %v1258, 64
        %v1268 = vpop.permute.xlu0 %1267
        %1269 = vrot.lane.b32.xlu0 %v1262, 64
        %v1270 = vpop.permute.xlu0 %1269
        %1275 = vst.msk [vmem:[%s300 + $0x5] sm:$0x1] %vm1112, %v1264
        %1276 = vst.msk [vmem:[%s300 + $0xd] sm:$0x1] %vm1112, %v1266
        %1277 = vst.msk [vmem:[%s300 + $0x15] sm:$0x1] %vm1112, %v1268
        %1278 = vst.msk [vmem:[%s300 + $0x1d] sm:$0x1] %vm1112, %v1270
        %v1281 = vunpack.c.l.s4 1966171168
        %v1282 = vunpack.c.0.s8 %v1281
        %v1283 = vlaneseq
        %v1284 = vshrl.u32 %v1283, 7
        %v1285 = vsub.s32 %v1282, %v1284
        %v1286 = vrot.slane %v1081, %v1285
        %v1287 = vcombine.high %v1286, %v1286
        %v1289 = vunpack.c.l.s4 1966171168
        %v1290 = vunpack.c.0.s8 %v1289
        %v1291 = vlaneseq
        %v1292 = vshrl.u32 %v1291, 7
        %v1293 = vsub.s32 %v1290, %v1292
        %v1294 = vrot.slane %v1286, %v1293
        %v1296 = vunpack.c.l.s4 1966171168
        %v1297 = vunpack.c.0.s8 %v1296
        %v1298 = vlaneseq
        %v1299 = vshrl.u32 %v1298, 7
        %v1300 = vsub.s32 %v1297, %v1299
        %v1301 = vrot.slane %v1287, %v1300
        %v1302 = vcombine.high %v1294, %v1294
        %v1303 = vcombine.high %v1301, %v1301
        %1308 = vst.msk [vmem:[%s300 + $0x6] sm:$0x1] %vm1112, %v1294
        %1309 = vst.msk [vmem:[%s300 + $0xe] sm:$0x1] %vm1112, %v1301
        %1310 = vst.msk [vmem:[%s300 + $0x16] sm:$0x1] %vm1112, %v1302
        %1311 = vst.msk [vmem:[%s300 + $0x1e] sm:$0x1] %vm1112, %v1303
        %v1312 = vlaneseq
        %v1313 = vshrl.u32 %v1312, 7
        %v1314 = vsub.s32 0, %v1313
        %v1315 = vrot.slane %v1294, %v1314
        %v1316 = vlaneseq
        %v1317 = vshrl.u32 %v1316, 7
        %v1318 = vsub.s32 0, %v1317
        %v1319 = vrot.slane %v1301, %v1318
        %v1320 = vlaneseq
        %v1321 = vshrl.u32 %v1320, 7
        %v1322 = vsub.s32 0, %v1321
        %v1323 = vrot.slane %v1302, %v1322
        %v1324 = vlaneseq
        %v1325 = vshrl.u32 %v1324, 7
        %v1326 = vsub.s32 0, %v1325
        %v1327 = vrot.slane %v1303, %v1326
        %1328 = vrot.lane.b32.xlu0 %v1315, 64
        %v1329 = vpop.permute.xlu0 %1328
        %1330 = vrot.lane.b32.xlu0 %v1319, 64
        %v1331 = vpop.permute.xlu0 %1330
        %1332 = vrot.lane.b32.xlu0 %v1323, 64
        %v1333 = vpop.permute.xlu0 %1332
        %1334 = vrot.lane.b32.xlu0 %v1327, 64
        %v1335 = vpop.permute.xlu0 %1334
        %1340 = vst.msk [vmem:[%s300 + $0x7] sm:$0x1] %vm1112, %v1329
        %1341 = vst.msk [vmem:[%s300 + $0xf] sm:$0x1] %vm1112, %v1331
        %1342 = vst.msk [vmem:[%s300 + $0x17] sm:$0x1] %vm1112, %v1333
        %1343 = vst.msk [vmem:[%s300 + $0x1f] sm:$0x1] %vm1112, %v1335
        %s1344 = sand.u32 %s180, 1
        %s1345 = sand.u32 %s180, 1
        %s1346 = smul.addr %s1345, 32
        %s1347 = scalar_lea.vmem [#allocation4], %s1346
        // Predicated region
        $region49: #{subpixel_conv_block.1} parent=43 // pred_check
          %p1348 = pneg %p190
        $region50: #{subpixel_conv_block.1} parent=43 // pred_check_branch
          %1350 = sbr.rel (%p1348) target = $region52
        $region51: #{subpixel_conv_block.1} parent=43 // pred_region
          %s1351 = smul.addr %s22, 8
          %s1352 = sadd.s32 %s23, %s1351
          %s1353 = smul.addr %s1352, 8
          %s1354 = scalar_lea.vmem %s6, %s1353
          // Predicated region
          $region53: #{subpixel_conv_block.1} parent=51 // pred_check
            _
          $region54: #{subpixel_conv_block.1} parent=51 // pred_check_branch
            %1356 = sbr.rel (0) target = $region56
          $region55: #{subpixel_conv_block.1} parent=51 // pred_region
            // Predicated region
            $region57: #{subpixel_conv_block.1} parent=55 // pred_check
              _
            $region58: #{subpixel_conv_block.1} parent=55 // pred_check_branch
              %1358 = sbr.rel (0) target = $region60
            $region59: #{subpixel_conv_block.1} parent=55 // pred_region
              // Predicated region
              $region72: #{subpixel_conv_block.1} parent=59 // pred_check
                _
              $region73: #{subpixel_conv_block.1} parent=59 // pred_check_branch
                %1379 = sbr.rel (0) target = $region75
              $region74: #{subpixel_conv_block.1} parent=59 // pred_region
                loop: start=0, step=1, limit=1
                $region76: #{subpixel_conv_block.1} parent=74 // loop_pre_header
                  _
                $region77: #{subpixel_conv_block.1} parent=74 // loop_header
                  %s1381 = sphi 0, %s1385
                  %p1382 = scmp.ge.s32.totalorder %s1381, 1
                  %s1386 = sphi %s1347, %s1347
                  %s1387 = sphi %s1354, %s1354
                $region78: #{subpixel_conv_block.1} parent=74 // loop_header_branch
                  %1384 = sbr.rel (%p1382) target = $region82
                $region79: #{subpixel_conv_block.1} parent=74 // loop_body
                  %v1388 = vld [vmem:[%s1386] sm:$0xff]
                  %1389 = vst [vmem:[%s1387] sm:$0xff] %v1388
                  %v1390 = vld [vmem:[%s1386 + $0x8] sm:$0xff]
                  %1391 = vst [vmem:[%s1387 + $0x10] sm:$0xff] %v1390
                  %v1392 = vld [vmem:[%s1386 + $0x10] sm:$0xff]
                  %1393 = vst [vmem:[%s1387 + $0x20] sm:$0xff] %v1392
                  %v1394 = vld [vmem:[%s1386 + $0x18] sm:$0xff]
                  %1395 = vst [vmem:[%s1387 + $0x30] sm:$0xff] %v1394
                $region80: #{subpixel_conv_block.1} parent=74 // loop_footer
                  %s1385 = sadd.s32 1, %s1381
                $region81: #{subpixel_conv_block.1} parent=74 // loop_footer_branch
                  %1380 = sbr.rel target = $region77
                $region82: #{subpixel_conv_block.1} parent=74 // loop_exit
                  _
              $region75: #{subpixel_conv_block.1} parent=59 // pred_fallthru
                _
              // Predicated region
              $region83: #{subpixel_conv_block.1} parent=59 // pred_check
                _
              $region84: #{subpixel_conv_block.1} parent=59 // pred_check_branch
                %1397 = sbr.rel target = $region86
              $region85: #{subpixel_conv_block.1} parent=59 // pred_region
                _
              $region86: #{subpixel_conv_block.1} parent=59 // pred_fallthru
                _
            $region60: #{subpixel_conv_block.1} parent=55 // pred_fallthru
              _
            // Predicated region
            $region61: #{subpixel_conv_block.1} parent=55 // pred_check
              _
            $region62: #{subpixel_conv_block.1} parent=55 // pred_check_branch
              %1360 = sbr.rel target = $region64
            $region63: #{subpixel_conv_block.1} parent=55 // pred_region
              loop: start=0, step=1, limit=1
              $region65: #{subpixel_conv_block.1} parent=63 // loop_pre_header
                _
              $region66: #{subpixel_conv_block.1} parent=63 // loop_header
                %s1363 = sphi 0, %s1367
                %p1364 = scmp.ge.s32.totalorder %s1363, 1
                %s1368 = sphi %s1347, %s1347
                %s1369 = sphi %s1354, %s1354
              $region67: #{subpixel_conv_block.1} parent=63 // loop_header_branch
                %1366 = sbr.rel (%p1364) target = $region71
              $region68: #{subpixel_conv_block.1} parent=63 // loop_body
                %v1370 = vld [vmem:[%s1368] sm:$0xff]
                %1371 = vst [vmem:[%s1369] sm:$0xff] %v1370
                %v1372 = vld [vmem:[%s1368 + $0x8] sm:$0xff]
                %1373 = vst [vmem:[%s1369 + $0x10] sm:$0xff] %v1372
                %v1374 = vld [vmem:[%s1368 + $0x10] sm:$0xff]
                %1375 = vst [vmem:[%s1369 + $0x20] sm:$0xff] %v1374
                %v1376 = vld [vmem:[%s1368 + $0x18] sm:$0xff]
                %1377 = vst [vmem:[%s1369 + $0x30] sm:$0xff] %v1376
              $region69: #{subpixel_conv_block.1} parent=63 // loop_footer
                %s1367 = sadd.s32 1, %s1363
              $region70: #{subpixel_conv_block.1} parent=63 // loop_footer_branch
                %1362 = sbr.rel target = $region66
              $region71: #{subpixel_conv_block.1} parent=63 // loop_exit
                _
            $region64: #{subpixel_conv_block.1} parent=55 // pred_fallthru
              _
          $region56: #{subpixel_conv_block.1} parent=51 // pred_fallthru
            _
          %1398 = vnop
        $region52: #{subpixel_conv_block.1} parent=43 // pred_fallthru
          _
      $region44: #{subpixel_conv_block.1} parent=5 // pred_fallthru
        _
      %p1399 = scmp.le.s32.totalorder 2, %s13
      // Predicated region
      $region87: #{subpixel_conv_block.1} parent=5 // pred_check
        %p1400 = pneg %p1399
      $region88: #{subpixel_conv_block.1} parent=5 // pred_check_branch
        %1402 = sbr.rel (%p1400) target = $region90
      $region89: #{subpixel_conv_block.1} parent=5 // pred_region
        %s1403 = ssub.s32 %s13, 2
        // Predicated region
        $region91: #{subpixel_conv_block.1} parent=89 // pred_check
          %p1404 = pneg %p196
        $region92: #{subpixel_conv_block.1} parent=89 // pred_check_branch
          %1406 = sbr.rel (%p1404) target = $region94
        $region93: #{subpixel_conv_block.1} parent=89 // pred_region
          %s1407 = sand.u32 %s181, 1
          %s1408 = sand.u32 %s181, 1
          %s1409 = smul.addr %s1408, 32
          %s1410 = scalar_lea.vmem [#allocation4], %s1409
        $region94: #{subpixel_conv_block.1} parent=89 // pred_fallthru
          _
      $region90: #{subpixel_conv_block.1} parent=5 // pred_fallthru
        _
    $region6: #{subpixel_conv_block.1} parent=1 // loop_footer
      %s17 = sadd.s32 1, %s13
    $region7: #{subpixel_conv_block.1} parent=1 // loop_footer_branch
      %12 = sbr.rel target = $region3
    $region8: #{subpixel_conv_block.1} parent=1 // loop_exit
      _
    %1411 = vsyncpa [#allocation3], 1
    %s1412 = scalar_lea.sflag [#allocation3], 1
    %1413 = vsyncpa %s1412, 1

</llo_original>
